<compile_context>
chip_gen: v6e
topology: v6e:2x2x1
jax: 0.10.0
libtpu: 0.0.40
codegen_flags: <defaults>
</compile_context>

<pallas_src>
import math
import numpy as np
import jax
import jax.numpy as jnp
from jax.experimental import pallas as pl
from jax.experimental.pallas import tpu as pltpu


# --------------------------------------------------------------------------
# Fused kernel: height-upsample -> (implicit concat) conv1+BN1+ReLU -> conv2+bias+ReLU
# --------------------------------------------------------------------------

def upblock_kernel(down_ref, skip_ref, mh_ref, w1_ref, b1_ref, w2_ref, b2_ref,
                   o_ref, x_pad, y_pad):
    f32 = jnp.float32
    bf16 = jnp.bfloat16
    H2 = o_ref.shape[0]                 # 2*H output rows
    ku = down_ref.shape[1]              # lane width of the (padded) down branch
    K1 = x_pad.shape[1]                 # ku + 2W*Cs  (conv1 K dimension)

    # --- height-only bilinear 2x upsample (align_corners=True); the width upsample and
    #     the x-direction zero padding are folded into the conv1 band weights ---
    t = jnp.dot(mh_ref[...], down_ref[...], preferred_element_type=f32)   # (H2, ku)

    # --- combined, row-halo-padded conv1 input: lanes [0:ku)=up branch, [ku:K1)=skip.
    #     The channel concat of the reference module is therefore free. ---
    zx = jnp.zeros((1, K1), f32)
    x_pad[0:1, :] = zx
    x_pad[H2 + 1:H2 + 2, :] = zx
    x_pad[1:H2 + 1, 0:ku] = t
    x_pad[1:H2 + 1, ku:K1] = skip_ref[...].astype(f32)

    # --- conv1 (+ folded BN1) + ReLU: three banded bf16 matmuls, K = K1 (=256 here) ---
    acc1 = jnp.dot(x_pad[0:H2, :].astype(bf16), w1_ref[0], preferred_element_type=f32)
    acc1 = acc1 + jnp.dot(x_pad[1:H2 + 1, :].astype(bf16), w1_ref[1],
                          preferred_element_type=f32)
    acc1 = acc1 + jnp.dot(x_pad[2:H2 + 2, :].astype(bf16), w1_ref[2],
                          preferred_element_type=f32)
    y1 = jnp.maximum(acc1 + b1_ref[...], 0.0)

    zy = jnp.zeros((1, y_pad.shape[1]), f32)
    y_pad[0:1, :] = zy
    y_pad[H2 + 1:H2 + 2, :] = zy
    y_pad[1:H2 + 1, :] = y1

    # --- conv2 + bias + ReLU (bn2 output unused on the IPCPA='False' path) ---
    acc2 = jnp.dot(y_pad[0:H2, :].astype(bf16), w2_ref[0], preferred_element_type=f32)
    acc2 = acc2 + jnp.dot(y_pad[1:H2 + 1, :].astype(bf16), w2_ref[1],
                          preferred_element_type=f32)
    acc2 = acc2 + jnp.dot(y_pad[2:H2 + 2, :].astype(bf16), w2_ref[2],
                          preferred_element_type=f32)
    o_ref[...] = jnp.maximum(acc2 + b2_ref[...], 0.0).astype(o_ref.dtype)


# --------------------------------------------------------------------------
# Host-side parameter preparation (BN folding + banded / WM-folded weight matrices)
# --------------------------------------------------------------------------

def _interp_matrix(n_in, n_out):
    """align_corners=True bilinear interpolation matrix (n_out, n_in), numpy."""
    m = np.zeros((n_out, n_in), dtype=np.float32)
    if n_in == 1:
        m[:, 0] = 1.0
        return m
    scale = (n_in - 1) / (n_out - 1)
    for p in range(n_out):
        src = p * scale
        i0 = min(int(np.floor(src)), n_in - 1)
        i1 = min(i0 + 1, n_in - 1)
        w1 = src - i0
        m[p, i0] += 1.0 - w1
        m[p, i1] += w1
    return m


def _band_matrices(w_hwio, width):
    """3x3 conv (padding=1) along x as 3 banded matrices, one per ky.

    w_hwio: (3, 3, Cin, Cout) numpy.
    band[ky, xin*Cin+ci, x*Cout+co] = w[ky, xin-x+1, ci, co]  (zero outside the band,
    which also implements the x-direction zero padding)."""
    Cin, Cout = w_hwio.shape[2], w_hwio.shape[3]
    bands = np.zeros((3, width * Cin, width * Cout), dtype=np.float32)
    for ky in range(3):
        for x in range(width):
            for kx in range(3):
                xin = x + kx - 1
                if 0 <= xin < width:
                    bands[ky, xin * Cin:(xin + 1) * Cin,
                          x * Cout:(x + 1) * Cout] = w_hwio[ky, kx]
    return bands


def prepare_upblock_params(w1, b1, gamma1, beta1, rmean1, rvar1, eps, w2, b2,
                           c_down, c_skip, H, W):
    """Fold BN1 (inference) into conv1, fold the width-upsample into the up-branch
    bands, and lane-concatenate up/skip into one bf16 band weight."""
    w1 = np.asarray(w1, np.float32)
    w2 = np.asarray(w2, np.float32)
    b1 = np.asarray(b1, np.float32)
    b2 = np.asarray(b2, np.float32)
    gamma1 = np.asarray(gamma1, np.float32)
    beta1 = np.asarray(beta1, np.float32)
    rmean1 = np.asarray(rmean1, np.float32)
    rvar1 = np.asarray(rvar1, np.float32)

    scale1 = gamma1 / np.sqrt(rvar1 + eps)
    w1_folded = w1 * scale1[None, None, None, :]          # BN scale folded into weights
    bias1 = beta1 + scale1 * (b1 - rmean1)                 # conv1 bias + BN shift folded

    Cout = w1.shape[-1]
    H2, W2 = 2 * H, 2 * W
    N = W2 * Cout

    mh = _interp_matrix(H, H2)                             # (2H, H) height upsample
    mw = _interp_matrix(W, W2)                             # (2W, W) width upsample
    # width-interp in flat layout: WM[w*Cd+c, q*Cd+c] = mw[q, w]
    wm = np.einsum("qw,cd->wcqd", mw, np.eye(c_down, dtype=np.float32))
    wm = wm.reshape(W * c_down, W2 * c_down)

    # up-branch bands with WM folded in:  (3, W*Cd, N)
    w1u = _band_matrices(w1_folded[:, :, :c_down, :], W2)     # (3, W2*Cd, N)
    w1u_fold = np.einsum("ab,nbc->nac", wm, w1u)               # (3, W*Cd, N)
    w1s = _band_matrices(w1_folded[:, :, c_down:, :], W2)      # (3, W2*Cs, N)

    ku = W * c_down
    ku_pad = ((ku + 127) // 128) * 128       # lane-align the up branch (zero rows below)
    ks = W2 * c_skip
    K1 = ku_pad + ks

    w1c = np.zeros((3, K1, N), np.float32)
    w1c[:, :ku, :] = w1u_fold
    w1c[:, ku_pad:, :] = w1s

    w2b = _band_matrices(w2, W2)                               # (3, N, N)

    return dict(
        mh=jnp.asarray(mh, jnp.float32),
        w1=jnp.asarray(w1c, jnp.bfloat16),
        b1=jnp.asarray(np.tile(bias1, W2)[None, :], jnp.float32),     # (1, N)
        w2=jnp.asarray(w2b, jnp.bfloat16),
        b2=jnp.asarray(np.tile(b2, W2)[None, :], jnp.float32),         # (1, N)
        ku_pad=ku_pad,
        out_channels=Cout,
    )


# --------------------------------------------------------------------------
# Wrappers
# --------------------------------------------------------------------------

def upblock_forward_flat(down_flat, skip_flat, prep):
    """Flat-layout entry point: down (B, H, W*Cd), skip (B, 2H, 2W*Cs) ->
    (B, 2H, 2W*Cout).  Use this if the surrounding model carries the flat layout."""
    B, H, ku = down_flat.shape
    _, H2, ks = skip_flat.shape
    ku_pad = prep["ku_pad"]
    N = prep["b1"].shape[1]
    K1 = ku_pad + ks
    assert prep["w1"].shape == (3, K1, N)

    if ku_pad > ku:   # lane-align the down branch so every in-kernel store is tile-aligned
        down_flat = jnp.pad(down_flat, ((0, 0), (0, 0), (0, ku_pad - ku)))
    skip_bf16 = skip_flat.astype(jnp.bfloat16)   # activations feeding the MXU are bf16

    return pl.pallas_call(
        upblock_kernel,
        out_shape=jax.ShapeDtypeStruct((B, H2, N), down_flat.dtype),
        grid=(B,),
        in_specs=[
            pl.BlockSpec((pl.Squeezed(), H, ku_pad), lambda b: (b, 0, 0)),
            pl.BlockSpec((pl.Squeezed(), H2, ks), lambda b: (b, 0, 0)),
            pl.BlockSpec((H2, H), lambda b: (0, 0)),
            pl.BlockSpec((3, K1, N), lambda b: (0, 0, 0)),
            pl.BlockSpec((1, N), lambda b: (0, 0)),
            pl.BlockSpec((3, N, N), lambda b: (0, 0, 0)),
            pl.BlockSpec((1, N), lambda b: (0, 0)),
        ],
        out_specs=pl.BlockSpec((pl.Squeezed(), H2, N), lambda b: (b, 0, 0)),
        scratch_shapes=[
            pltpu.VMEM((H2 + 2, K1), jnp.float32),   # row-padded combined conv1 input
            pltpu.VMEM((H2 + 2, N), jnp.float32),    # row-padded conv1 output
        ],
        compiler_params=pltpu.CompilerParams(dimension_semantics=("parallel",)),
    )(down_flat, skip_bf16, prep["mh"], prep["w1"], prep["b1"], prep["w2"], prep["b2"])


def upblock_forward(down_input, skip_input, prep):
    """UpBlock forward (IPCPA='False').  NCHW in / NCHW out, like the PyTorch module."""
    B, Cd, H, W = down_input.shape
    _, Cs, H2, W2 = skip_input.shape
    Cout = prep["out_channels"]
    down_flat = jnp.transpose(down_input, (0, 2, 3, 1)).reshape(B, H, W * Cd)
    skip_flat = jnp.transpose(skip_input, (0, 2, 3, 1)).reshape(B, H2, W2 * Cs)
    out_flat = upblock_forward_flat(down_flat, skip_flat, prep)
    return jnp.transpose(out_flat.reshape(B, H2, W2, Cout), (0, 3, 1, 2))


# --------------------------------------------------------------------------
# Pure-JAX reference (independent bilinear implementation, f32 math)
# --------------------------------------------------------------------------

def _upsample_bilinear_ac(x_nchw, scale=2):
    """align_corners=True bilinear upsample, written directly (not via _interp_matrix)."""
    B, C, H, W = x_nchw.shape
    H2, W2 = scale * H, scale * W

    def coords(n_in, n_out):
        if n_in == 1:
            z = jnp.zeros((n_out,), jnp.float32)
            return z, jnp.zeros((n_out,), jnp.int32), jnp.zeros((n_out,), jnp.int32)
        src = jnp.arange(n_out, dtype=jnp.float32) * ((n_in - 1) / (n_out - 1))
        i0 = jnp.clip(jnp.floor(src).astype(jnp.int32), 0, n_in - 1)
        i1 = jnp.clip(i0 + 1, 0, n_in - 1)
        return src - i0.astype(jnp.float32), i0, i1

    wy, y0, y1 = coords(H, H2)
    wx, x0, x1 = coords(W, W2)
    top = (x_nchw[:, :, y0, :] * (1.0 - wy)[None, None, :, None]
           + x_nchw[:, :, y1, :] * wy[None, None, :, None])
    return top[:, :, :, x0] * (1.0 - wx) + top[:, :, :, x1] * wx


def _ref_conv(x_nhwc, w, scale, bias):
    y = jax.lax.conv_general_dilated(
        x_nhwc, w, (1, 1), "SAME", dimension_numbers=("NHWC", "HWIO", "NHWC"))
    y = y * scale.reshape(1, 1, 1, -1) + bias.reshape(1, 1, 1, -1)
    return jnp.maximum(y, 0.0)


def upblock_reference(down_input, skip_input, w1, scale1, bias1, w2, bias2):
    up = _upsample_bilinear_ac(down_input, 2)
    x = jnp.concatenate([up, skip_input], axis=1)
    x = jnp.transpose(x, (0, 2, 3, 1))
    y = _ref_conv(x, w1, scale1, bias1)
    y = _ref_conv(y, w2, jnp.ones_like(bias2), bias2)
    return jnp.transpose(y, (0, 3, 1, 2))


# --------------------------------------------------------------------------
# Main
# --------------------------------------------------------------------------

if __name__ == "__main__":
    key = jax.random.PRNGKey(0)
    k = jax.random.split(key, 10)

    # Shapes: down (B, C_down, H, W), skip (B, C_skip, 2H, 2W)
    B, C_down, H, W = 2, 8, 8, 8
    C_skip = 8
    in_ch = C_down + C_skip      # in_channels of DoubleConv
    out_ch = 8                   # out_channels (2W*out_ch = 128 -> lane-dense output)
    eps = 1e-5

    down_input = jax.random.normal(k[0], (B, C_down, H, W), jnp.float32)
    skip_input = jax.random.normal(k[1], (B, C_skip, 2 * H, 2 * W), jnp.float32)

    # Deterministic synthetic parameters (HWIO conv weights).
    w1 = jax.random.normal(k[2], (3, 3, in_ch, out_ch), jnp.float32) / math.sqrt(9 * in_ch)
    b1 = jax.random.normal(k[3], (out_ch,), jnp.float32) * 0.1
    gamma1 = 1.0 + 0.1 * jax.random.normal(k[4], (out_ch,), jnp.float32)
    beta1 = 0.1 * jax.random.normal(k[5], (out_ch,), jnp.float32)
    rmean1 = 0.1 * jax.random.normal(k[6], (out_ch,), jnp.float32)
    rvar1 = 1.0 + 0.1 * jnp.abs(jax.random.normal(k[7], (out_ch,), jnp.float32))

    w2 = jax.random.normal(k[8], (3, 3, out_ch, out_ch), jnp.float32) / math.sqrt(9 * out_ch)
    b2 = jax.random.normal(k[9], (out_ch,), jnp.float32) * 0.1
    # (bn2 parameters exist in the module but its output is unused when IPCPA='False'.)

    prep = prepare_upblock_params(w1, b1, gamma1, beta1, rmean1, rvar1, eps, w2, b2,
                                  C_down, C_skip, H, W)

    out = jax.block_until_ready(upblock_forward(down_input, skip_input, prep))

    # Reference path (f32 math, same inference-mode BN folding).
    scale1 = gamma1 / jnp.sqrt(rvar1 + eps)
    bias1 = beta1 + scale1 * (b1 - rmean1)
    ref = jax.block_until_ready(
        upblock_reference(down_input, skip_input, w1, scale1, bias1, w2, b2))

    assert out.shape == (B, out_ch, 2 * H, 2 * W), out.shape
    # Tolerance covers bf16 weight/activation rounding through two 3x3 convs.
    np.testing.assert_allclose(np.asarray(out), np.asarray(ref), rtol=5e-2, atol=5e-2)

    print("KERNEL_OK")
</pallas_src>

<mosaic_0001>
module attributes {stable_mosaic.version = 11 : i64} {
  func.func @upblock_kernel(%arg0: i32, %arg1: memref<1x8x128xf32, #tpu.memory_space<vmem>>, %arg2: memref<1x16x128xbf16, #tpu.memory_space<vmem>>, %arg3: memref<16x8xf32, #tpu.memory_space<vmem>>, %arg4: memref<3x256x128xbf16, #tpu.memory_space<vmem>>, %arg5: memref<1x128xf32, #tpu.memory_space<vmem>>, %arg6: memref<3x128x128xbf16, #tpu.memory_space<vmem>>, %arg7: memref<1x128xf32, #tpu.memory_space<vmem>>, %arg8: memref<1x16x128xf32, #tpu.memory_space<vmem>>, %arg9: memref<18x256xf32, #tpu.memory_space<vmem>>, %arg10: memref<18x128xf32, #tpu.memory_space<vmem>>) attributes {dimension_semantics = [#tpu.dimension_semantics<parallel>], iteration_bounds = array<i64: 2>, scalar_prefetch = 0 : i64, scratch_operands = 2 : i64, tpu.core_type = #tpu.core_type<tc>, window_params = [{transform_indices = @transform_0, window_bounds = array<i64: 1, 8, 128>}, {transform_indices = @transform_1, window_bounds = array<i64: 1, 16, 128>}, {pipeline_mode = #tpu.pipeline_mode<synchronous>, transform_indices = @transform_2, window_bounds = array<i64: 16, 8>}, {pipeline_mode = #tpu.pipeline_mode<synchronous>, transform_indices = @transform_3, window_bounds = array<i64: 3, 256, 128>}, {pipeline_mode = #tpu.pipeline_mode<synchronous>, transform_indices = @transform_4, window_bounds = array<i64: 1, 128>}, {pipeline_mode = #tpu.pipeline_mode<synchronous>, transform_indices = @transform_5, window_bounds = array<i64: 3, 128, 128>}, {pipeline_mode = #tpu.pipeline_mode<synchronous>, transform_indices = @transform_6, window_bounds = array<i64: 1, 128>}, {transform_indices = @transform_7, window_bounds = array<i64: 1, 16, 128>}]} {
    %c0 = arith.constant 0 : index
    %c0_0 = arith.constant 0 : index
    %0 = vector.load %arg3[%c0, %c0_0] : memref<16x8xf32, #tpu.memory_space<vmem>>, vector<16x8xf32>
    %c0_1 = arith.constant 0 : index
    %c0_2 = arith.constant 0 : index
    %c0_3 = arith.constant 0 : index
    %1 = vector.load %arg1[%c0_1, %c0_2, %c0_3] : memref<1x8x128xf32, #tpu.memory_space<vmem>>, vector<1x8x128xf32>
    %2 = vector.shape_cast %1 : vector<1x8x128xf32> to vector<8x128xf32>
    %cst = arith.constant dense<0.000000e+00> : vector<16x128xf32>
    %3 = tpu.matmul %0, %2, %cst {dimension_numbers = #tpu.dot_dimension_numbers<[1], [0], [0], [1], [0, 0, 1, 1], [], []>} : vector<16x8xf32>, vector<8x128xf32>, vector<16x128xf32> -> vector<16x128xf32>
    %cst_4 = arith.constant 0.000000e+00 : f32
    %4 = vector.broadcast %cst_4 : f32 to vector<1x256xf32>
    %c0_5 = arith.constant 0 : index
    %c0_6 = arith.constant 0 : index
    %5 = vector.load %arg9[%c0_5, %c0_6] : memref<18x256xf32, #tpu.memory_space<vmem>>, vector<1x256xf32>
    tpu.vector_store %arg9[%c0_5, %c0_6], %4 {strides = array<i32>} : memref<18x256xf32, #tpu.memory_space<vmem>>, vector<1x256xf32>,
    %c17 = arith.constant 17 : index
    %c0_7 = arith.constant 0 : index
    %6 = vector.load %arg9[%c17, %c0_7] : memref<18x256xf32, #tpu.memory_space<vmem>>, vector<1x256xf32>
    tpu.vector_store %arg9[%c17, %c0_7], %4 {strides = array<i32>} : memref<18x256xf32, #tpu.memory_space<vmem>>, vector<1x256xf32>,
    %c1 = arith.constant 1 : index
    %c0_8 = arith.constant 0 : index
    %7 = vector.load %arg9[%c1, %c0_8] : memref<18x256xf32, #tpu.memory_space<vmem>>, vector<16x128xf32>
    tpu.vector_store %arg9[%c1, %c0_8], %3 {strides = array<i32>} : memref<18x256xf32, #tpu.memory_space<vmem>>, vector<16x128xf32>,
    %c0_9 = arith.constant 0 : index
    %c0_10 = arith.constant 0 : index
    %c0_11 = arith.constant 0 : index
    %8 = vector.load %arg2[%c0_9, %c0_10, %c0_11] : memref<1x16x128xbf16, #tpu.memory_space<vmem>>, vector<1x16x128xbf16>
    %9 = vector.shape_cast %8 : vector<1x16x128xbf16> to vector<16x128xbf16>
    %10 = arith.extf %9 : vector<16x128xbf16> to vector<16x128xf32>
    %c1_12 = arith.constant 1 : index
    %c128 = arith.constant 128 : index
    %11 = vector.load %arg9[%c1_12, %c128] : memref<18x256xf32, #tpu.memory_space<vmem>>, vector<16x128xf32>
    tpu.vector_store %arg9[%c1_12, %c128], %10 {strides = array<i32>} : memref<18x256xf32, #tpu.memory_space<vmem>>, vector<16x128xf32>,
    %c0_13 = arith.constant 0 : index
    %c0_14 = arith.constant 0 : index
    %12 = vector.load %arg9[%c0_13, %c0_14] : memref<18x256xf32, #tpu.memory_space<vmem>>, vector<16x256xf32>
    %13 = arith.truncf %12 : vector<16x256xf32> to vector<16x256xbf16>
    %c0_15 = arith.constant 0 : index
    %c0_16 = arith.constant 0 : index
    %c0_17 = arith.constant 0 : index
    %14 = vector.load %arg4[%c0_15, %c0_16, %c0_17] : memref<3x256x128xbf16, #tpu.memory_space<vmem>>, vector<1x256x128xbf16>
    %15 = vector.shape_cast %14 : vector<1x256x128xbf16> to vector<256x128xbf16>
    %cst_18 = arith.constant dense<0.000000e+00> : vector<16x128xf32>
    %16 = tpu.matmul %13, %15, %cst_18 {dimension_numbers = #tpu.dot_dimension_numbers<[1], [0], [0], [1], [0, 0, 1, 1], [], []>} : vector<16x256xbf16>, vector<256x128xbf16>, vector<16x128xf32> -> vector<16x128xf32>
    %c1_19 = arith.constant 1 : index
    %c0_20 = arith.constant 0 : index
    %17 = vector.load %arg9[%c1_19, %c0_20] : memref<18x256xf32, #tpu.memory_space<vmem>>, vector<16x256xf32>
    %18 = arith.truncf %17 : vector<16x256xf32> to vector<16x256xbf16>
    %c1_21 = arith.constant 1 : index
    %c0_22 = arith.constant 0 : index
    %c0_23 = arith.constant 0 : index
    %19 = vector.load %arg4[%c1_21, %c0_22, %c0_23] : memref<3x256x128xbf16, #tpu.memory_space<vmem>>, vector<1x256x128xbf16>
    %20 = vector.shape_cast %19 : vector<1x256x128xbf16> to vector<256x128xbf16>
    %cst_24 = arith.constant dense<0.000000e+00> : vector<16x128xf32>
    %21 = tpu.matmul %18, %20, %cst_24 {dimension_numbers = #tpu.dot_dimension_numbers<[1], [0], [0], [1], [0, 0, 1, 1], [], []>} : vector<16x256xbf16>, vector<256x128xbf16>, vector<16x128xf32> -> vector<16x128xf32>
    %22 = arith.addf %16, %21 : vector<16x128xf32>
    %c2 = arith.constant 2 : index
    %c0_25 = arith.constant 0 : index
    %23 = vector.load %arg9[%c2, %c0_25] : memref<18x256xf32, #tpu.memory_space<vmem>>, vector<16x256xf32>
    %24 = arith.truncf %23 : vector<16x256xf32> to vector<16x256xbf16>
    %c2_26 = arith.constant 2 : index
    %c0_27 = arith.constant 0 : index
    %c0_28 = arith.constant 0 : index
    %25 = vector.load %arg4[%c2_26, %c0_27, %c0_28] : memref<3x256x128xbf16, #tpu.memory_space<vmem>>, vector<1x256x128xbf16>
    %26 = vector.shape_cast %25 : vector<1x256x128xbf16> to vector<256x128xbf16>
    %cst_29 = arith.constant dense<0.000000e+00> : vector<16x128xf32>
    %27 = tpu.matmul %24, %26, %cst_29 {dimension_numbers = #tpu.dot_dimension_numbers<[1], [0], [0], [1], [0, 0, 1, 1], [], []>} : vector<16x256xbf16>, vector<256x128xbf16>, vector<16x128xf32> -> vector<16x128xf32>
    %28 = arith.addf %22, %27 : vector<16x128xf32>
    %c0_30 = arith.constant 0 : index
    %c0_31 = arith.constant 0 : index
    %29 = vector.load %arg5[%c0_30, %c0_31] : memref<1x128xf32, #tpu.memory_space<vmem>>, vector<1x128xf32>
    %30 = vector.broadcast %29 : vector<1x128xf32> to vector<16x128xf32>
    %31 = arith.addf %28, %30 : vector<16x128xf32>
    %cst_32 = arith.constant 0.000000e+00 : f32
    %32 = vector.broadcast %cst_32 : f32 to vector<16x128xf32>
    %33 = arith.maximumf %31, %32 : vector<16x128xf32>
    %cst_33 = arith.constant 0.000000e+00 : f32
    %34 = vector.broadcast %cst_33 : f32 to vector<1x128xf32>
    %c0_34 = arith.constant 0 : index
    %c0_35 = arith.constant 0 : index
    %35 = vector.load %arg10[%c0_34, %c0_35] : memref<18x128xf32, #tpu.memory_space<vmem>>, vector<1x128xf32>
    tpu.vector_store %arg10[%c0_34, %c0_35], %34 {strides = array<i32>} : memref<18x128xf32, #tpu.memory_space<vmem>>, vector<1x128xf32>,
    %c17_36 = arith.constant 17 : index
    %c0_37 = arith.constant 0 : index
    %36 = vector.load %arg10[%c17_36, %c0_37] : memref<18x128xf32, #tpu.memory_space<vmem>>, vector<1x128xf32>
    tpu.vector_store %arg10[%c17_36, %c0_37], %34 {strides = array<i32>} : memref<18x128xf32, #tpu.memory_space<vmem>>, vector<1x128xf32>,
    %c1_38 = arith.constant 1 : index
    %c0_39 = arith.constant 0 : index
    %37 = vector.load %arg10[%c1_38, %c0_39] : memref<18x128xf32, #tpu.memory_space<vmem>>, vector<16x128xf32>
    tpu.vector_store %arg10[%c1_38, %c0_39], %33 {strides = array<i32>} : memref<18x128xf32, #tpu.memory_space<vmem>>, vector<16x128xf32>,
    %c0_40 = arith.constant 0 : index
    %c0_41 = arith.constant 0 : index
    %38 = vector.load %arg10[%c0_40, %c0_41] : memref<18x128xf32, #tpu.memory_space<vmem>>, vector<16x128xf32>
    %39 = arith.truncf %38 : vector<16x128xf32> to vector<16x128xbf16>
    %c0_42 = arith.constant 0 : index
    %c0_43 = arith.constant 0 : index
    %c0_44 = arith.constant 0 : index
    %40 = vector.load %arg6[%c0_42, %c0_43, %c0_44] : memref<3x128x128xbf16, #tpu.memory_space<vmem>>, vector<1x128x128xbf16>
    %41 = vector.shape_cast %40 : vector<1x128x128xbf16> to vector<128x128xbf16>
    %cst_45 = arith.constant dense<0.000000e+00> : vector<16x128xf32>
    %42 = tpu.matmul %39, %41, %cst_45 {dimension_numbers = #tpu.dot_dimension_numbers<[1], [0], [0], [1], [0, 0, 1, 1], [], []>} : vector<16x128xbf16>, vector<128x128xbf16>, vector<16x128xf32> -> vector<16x128xf32>
    %c1_46 = arith.constant 1 : index
    %c0_47 = arith.constant 0 : index
    %43 = vector.load %arg10[%c1_46, %c0_47] : memref<18x128xf32, #tpu.memory_space<vmem>>, vector<16x128xf32>
    %44 = arith.truncf %43 : vector<16x128xf32> to vector<16x128xbf16>
    %c1_48 = arith.constant 1 : index
    %c0_49 = arith.constant 0 : index
    %c0_50 = arith.constant 0 : index
    %45 = vector.load %arg6[%c1_48, %c0_49, %c0_50] : memref<3x128x128xbf16, #tpu.memory_space<vmem>>, vector<1x128x128xbf16>
    %46 = vector.shape_cast %45 : vector<1x128x128xbf16> to vector<128x128xbf16>
    %cst_51 = arith.constant dense<0.000000e+00> : vector<16x128xf32>
    %47 = tpu.matmul %44, %46, %cst_51 {dimension_numbers = #tpu.dot_dimension_numbers<[1], [0], [0], [1], [0, 0, 1, 1], [], []>} : vector<16x128xbf16>, vector<128x128xbf16>, vector<16x128xf32> -> vector<16x128xf32>
    %48 = arith.addf %42, %47 : vector<16x128xf32>
    %c2_52 = arith.constant 2 : index
    %c0_53 = arith.constant 0 : index
    %49 = vector.load %arg10[%c2_52, %c0_53] : memref<18x128xf32, #tpu.memory_space<vmem>>, vector<16x128xf32>
    %50 = arith.truncf %49 : vector<16x128xf32> to vector<16x128xbf16>
    %c2_54 = arith.constant 2 : index
    %c0_55 = arith.constant 0 : index
    %c0_56 = arith.constant 0 : index
    %51 = vector.load %arg6[%c2_54, %c0_55, %c0_56] : memref<3x128x128xbf16, #tpu.memory_space<vmem>>, vector<1x128x128xbf16>
    %52 = vector.shape_cast %51 : vector<1x128x128xbf16> to vector<128x128xbf16>
    %cst_57 = arith.constant dense<0.000000e+00> : vector<16x128xf32>
    %53 = tpu.matmul %50, %52, %cst_57 {dimension_numbers = #tpu.dot_dimension_numbers<[1], [0], [0], [1], [0, 0, 1, 1], [], []>} : vector<16x128xbf16>, vector<128x128xbf16>, vector<16x128xf32> -> vector<16x128xf32>
    %54 = arith.addf %48, %53 : vector<16x128xf32>
    %c0_58 = arith.constant 0 : index
    %c0_59 = arith.constant 0 : index
    %55 = vector.load %arg7[%c0_58, %c0_59] : memref<1x128xf32, #tpu.memory_space<vmem>>, vector<1x128xf32>
    %56 = vector.broadcast %55 : vector<1x128xf32> to vector<16x128xf32>
    %57 = arith.addf %54, %56 : vector<16x128xf32>
    %cst_60 = arith.constant 0.000000e+00 : f32
    %58 = vector.broadcast %cst_60 : f32 to vector<16x128xf32>
    %59 = arith.maximumf %57, %58 : vector<16x128xf32>
    %c0_61 = arith.constant 0 : index
    %c0_62 = arith.constant 0 : index
    %c0_63 = arith.constant 0 : index
    %60 = vector.load %arg8[%c0_61, %c0_62, %c0_63] : memref<1x16x128xf32, #tpu.memory_space<vmem>>, vector<1x16x128xf32>
    %61 = vector.shape_cast %60 : vector<1x16x128xf32> to vector<16x128xf32>
    %62 = vector.shape_cast %59 : vector<16x128xf32> to vector<1x16x128xf32>
    tpu.vector_store %arg8[%c0_61, %c0_62, %c0_63], %62 {strides = array<i32>} : memref<1x16x128xf32, #tpu.memory_space<vmem>>, vector<1x16x128xf32>,
    return
  }
  func.func @transform_0(%arg0: i32) -> (i32, i32, i32) {
    %c0_i32 = arith.constant 0 : i32
    %c0_i32_0 = arith.constant 0 : i32
    %c0_i32_1 = arith.constant 0 : i32
    return %arg0, %c0_i32, %c0_i32_0 : i32, i32, i32
  }
  func.func @transform_1(%arg0: i32) -> (i32, i32, i32) {
    %c0_i32 = arith.constant 0 : i32
    %c0_i32_0 = arith.constant 0 : i32
    %c0_i32_1 = arith.constant 0 : i32
    return %arg0, %c0_i32, %c0_i32_0 : i32, i32, i32
  }
  func.func @transform_2(%arg0: i32) -> (i32, i32) {
    %c0_i32 = arith.constant 0 : i32
    %c0_i32_0 = arith.constant 0 : i32
    %c0_i32_1 = arith.constant 0 : i32
    return %c0_i32, %c0_i32_0 : i32, i32
  }
  func.func @transform_3(%arg0: i32) -> (i32, i32, i32) {
    %c0_i32 = arith.constant 0 : i32
    %c0_i32_0 = arith.constant 0 : i32
    %c0_i32_1 = arith.constant 0 : i32
    %c0_i32_2 = arith.constant 0 : i32
    return %c0_i32, %c0_i32_0, %c0_i32_1 : i32, i32, i32
  }
  func.func @transform_4(%arg0: i32) -> (i32, i32) {
    %c0_i32 = arith.constant 0 : i32
    %c0_i32_0 = arith.constant 0 : i32
    %c0_i32_1 = arith.constant 0 : i32
    return %c0_i32, %c0_i32_0 : i32, i32
  }
  func.func @transform_5(%arg0: i32) -> (i32, i32, i32) {
    %c0_i32 = arith.constant 0 : i32
    %c0_i32_0 = arith.constant 0 : i32
    %c0_i32_1 = arith.constant 0 : i32
    %c0_i32_2 = arith.constant 0 : i32
    return %c0_i32, %c0_i32_0, %c0_i32_1 : i32, i32, i32
  }
  func.func @transform_6(%arg0: i32) -> (i32, i32) {
    %c0_i32 = arith.constant 0 : i32
    %c0_i32_0 = arith.constant 0 : i32
    %c0_i32_1 = arith.constant 0 : i32
    return %c0_i32, %c0_i32_0 : i32, i32
  }
  func.func @transform_7(%arg0: i32) -> (i32, i32, i32) {
    %c0_i32 = arith.constant 0 : i32
    %c0_i32_0 = arith.constant 0 : i32
    %c0_i32_1 = arith.constant 0 : i32
    return %arg0, %c0_i32, %c0_i32_0 : i32, i32, i32
  }
}

</mosaic_0001>

<llo_original>
// kernel: tpu_custom_call.1
$region0: #{tpu_custom_call.1}
  #allocation0 [shape = 'u32[]', space=smem, size = 0x4, offset = 0x4, fixed_abs, tag = 'smem constant byte address 0x4 - core index']
  #allocation1 [shape = 'u32[144,128]{1,0:T(1,128)}', space=vmem, size = 0x12000, scoped, tag = 'internal scratch']
  #allocation2 [shape = 'f32[18,256]{1,0:T(8,128)}', space=vmem, size = 0x6000, scoped, tag = 'scratch operand']
  #allocation3 [shape = 'f32[18,128]{1,0:T(8,128)}', space=vmem, size = 0x3000, scoped, tag = 'scratch operand']
  %s0 = inlined_call_operand.vmem [shape: f32[2,8,128], index: 0, kind: input, shape index: {}]
  %s1 = inlined_call_operand.hbm [shape: bf16[2,16,128], index: 1, kind: input, shape index: {}]
  %s2 = inlined_call_operand.vmem [shape: f32[16,8], index: 2, kind: input, shape index: {}]
  %s3 = inlined_call_operand.hbm [shape: bf16[3,256,128], index: 3, kind: input, shape index: {}]
  %s4 = inlined_call_operand.vmem [shape: f32[1,128], index: 4, kind: input, shape index: {}]
  %s5 = inlined_call_operand.hbm [shape: bf16[3,128,128], index: 5, kind: input, shape index: {}]
  %s6 = inlined_call_operand.vmem [shape: f32[1,128], index: 6, kind: input, shape index: {}]
  %s7 = inlined_call_operand.hbm [shape: f32[2,16,128], index: 7, kind: output, shape index: {}]
  %s8 = sld [smem:[#allocation0]]
  $region73: #{tpu_custom_call.1} parent=0
    _
  %s10 = ssub.s32 1, %s8
  %s11 = scalar_select 0, %s10, %s8
  $region1: #{tpu_custom_call.1} parent=0
    #allocation4 [shape = 'u8[8192]{0}', space=vmem, size = 0x2000, scoped, tag = 'input window, operand 1']
    #allocation5 [shape = 's32[2]{0}', space=sflag, size = 0x8, scoped, tag = 'scoped memory for tpu_custom_call.1']
    #allocation6 [shape = 's32[2]{0}', space=sflag, size = 0x8, scoped, tag = 'scoped memory for tpu_custom_call.1']
    #allocation7 [shape = 'u8[196608]{0}', space=vmem, size = 0x30000, scoped, tag = 'input window, operand 3, single buffered']
    #allocation8 [shape = 's32[1]{0}', space=sflag, size = 0x4, scoped, tag = 'scoped memory for tpu_custom_call.1']
    #allocation9 [shape = 'u8[98304]{0}', space=vmem, size = 0x18000, scoped, tag = 'input window, operand 5, single buffered']
    #allocation10 [shape = 'u8[16384]{0}', space=vmem, size = 0x4000, scoped, tag = 'output window, operand 0']
    %12 = vsyncpa [#allocation5], 0
    %s13 = scalar_lea.sflag [#allocation5], 1
    %14 = vsyncpa %s13, 0
    %15 = vsyncpa [#allocation8], 0
    %16 = vsyncpa [#allocation6], 0
    %s17 = scalar_lea.sflag [#allocation6], 1
    %18 = vsyncpa %s17, 0
    loop: start=0, step=1, limit=4
    $region2: #{tpu_custom_call.1} parent=1 // loop_pre_header
      _
    $region3: #{tpu_custom_call.1} parent=1 // loop_header
      %s20 = sphi 0, %s24
      %p21 = scmp.ge.s32.totalorder %s20, 4
      %s30 = sphi 0, %s32
      %s33 = sphi 0, %s30
      %s34 = sphi 0, %s33
      %s50 = sphi 0, %s34
      %s56 = sphi 0, %s58
      %s59 = sphi 0, %s56
      %s60 = sphi 0, %s59
      %s76 = sphi 0, %s60
      %s80 = sphi 0, %s80
      %s82 = sphi 0, %s80
      %s83 = sphi 0, %s82
      %s97 = sphi 0, %s83
      %s101 = sphi 0, %s101
      %s103 = sphi 0, %s101
      %s104 = sphi 0, %s103
      %s118 = sphi 0, %s104
      %s122 = sphi 0, %s122
      %s124 = sphi 0, %s122
      %s125 = sphi 0, %s124
      %s139 = sphi 0, %s125
      %s143 = sphi 0, %s143
      %s145 = sphi 0, %s143
      %s146 = sphi 0, %s145
      %s160 = sphi 0, %s146
      %s164 = sphi 0, %s164
      %s166 = sphi 0, %s164
      %s167 = sphi 0, %s166
      %s181 = sphi 0, %s167
      %s187 = sphi 0, %s189
      %s190 = sphi 0, %s187
      %s191 = sphi 0, %s190
      %s207 = sphi 0, %s191
    $region4: #{tpu_custom_call.1} parent=1 // loop_header_branch
      %23 = sbr.rel (%p21) target = $region8
    $region5: #{tpu_custom_call.1} parent=1 // loop_body
      %s25 = ssub.s32 %s20, 1
      %s26 = ssub.s32 %s20, 2
      %s27 = sadd.s32 %s20, 1
      %s28 = ssub.s32 %s20, %s27
      %p29 = scmp.eq.s32.totalorder %s28, 0
      %s31 = sadd.s32 %s30, 1
      %s32 = scalar_select %p29, %s30, %s31
      %p35 = pneg %p29
      %p36 = scmp.eq.s32.totalorder %s20, 1
      %p37 = por %p35, %p36
      %p38 = scmp.ne.s32.totalorder %s30, %s33
      %p39 = scmp.eq.s32.totalorder %s20, 0
      %p40 = por %p38, %p39
      %p41 = scmp.ne.s32.totalorder %s30, %s33
      %p42 = scmp.eq.s32.totalorder %s25, 1
      %p43 = por %p41, %p42
      %p44 = scmp.ne.s32.totalorder %s33, %s34
      %p45 = scmp.eq.s32.totalorder %s25, 0
      %p46 = por %p44, %p45
      %p47 = scmp.ne.s32.totalorder %s33, %s34
      %p48 = scmp.eq.s32.totalorder %s26, 1
      %p49 = por %p47, %p48
      %p51 = scmp.ne.s32.totalorder %s34, %s50
      %p52 = scmp.eq.s32.totalorder %s26, 0
      %p53 = por %p51, %p52
      %s54 = ssub.s32 %s20, %s27
      %p55 = scmp.eq.s32.totalorder %s54, 0
      %s57 = sadd.s32 %s56, 1
      %s58 = scalar_select %p55, %s56, %s57
      %p61 = pneg %p55
      %p62 = scmp.eq.s32.totalorder %s20, 1
      %p63 = por %p61, %p62
      %p64 = scmp.ne.s32.totalorder %s56, %s59
      %p65 = scmp.eq.s32.totalorder %s20, 0
      %p66 = por %p64, %p65
      %p67 = scmp.ne.s32.totalorder %s56, %s59
      %p68 = scmp.eq.s32.totalorder %s25, 1
      %p69 = por %p67, %p68
      %p70 = scmp.ne.s32.totalorder %s59, %s60
      %p71 = scmp.eq.s32.totalorder %s25, 0
      %p72 = por %p70, %p71
      %p73 = scmp.ne.s32.totalorder %s59, %s60
      %p74 = scmp.eq.s32.totalorder %s26, 1
      %p75 = por %p73, %p74
      %p77 = scmp.ne.s32.totalorder %s60, %s76
      %p78 = scmp.eq.s32.totalorder %s26, 0
      %p79 = por %p77, %p78
      %s81 = sadd.s32 %s80, 1
      %p84 = scmp.eq.s32.totalorder %s20, 1
      %p85 = scmp.ne.s32.totalorder %s80, %s82
      %p86 = scmp.eq.s32.totalorder %s20, 0
      %p87 = por %p85, %p86
      %p88 = scmp.ne.s32.totalorder %s80, %s82
      %p89 = scmp.eq.s32.totalorder %s25, 1
      %p90 = por %p88, %p89
      %p91 = scmp.ne.s32.totalorder %s82, %s83
      %p92 = scmp.eq.s32.totalorder %s25, 0
      %p93 = por %p91, %p92
      %p94 = scmp.ne.s32.totalorder %s82, %s83
      %p95 = scmp.eq.s32.totalorder %s26, 1
      %p96 = por %p94, %p95
      %p98 = scmp.ne.s32.totalorder %s83, %s97
      %p99 = scmp.eq.s32.totalorder %s26, 0
      %p100 = por %p98, %p99
      %s102 = sadd.s32 %s101, 1
      %p105 = scmp.eq.s32.totalorder %s20, 1
      %p106 = scmp.ne.s32.totalorder %s101, %s103
      %p107 = scmp.eq.s32.totalorder %s20, 0
      %p108 = por %p106, %p107
      %p109 = scmp.ne.s32.totalorder %s101, %s103
      %p110 = scmp.eq.s32.totalorder %s25, 1
      %p111 = por %p109, %p110
      %p112 = scmp.ne.s32.totalorder %s103, %s104
      %p113 = scmp.eq.s32.totalorder %s25, 0
      %p114 = por %p112, %p113
      %p115 = scmp.ne.s32.totalorder %s103, %s104
      %p116 = scmp.eq.s32.totalorder %s26, 1
      %p117 = por %p115, %p116
      %p119 = scmp.ne.s32.totalorder %s104, %s118
      %p120 = scmp.eq.s32.totalorder %s26, 0
      %p121 = por %p119, %p120
      %s123 = sadd.s32 %s122, 1
      %p126 = scmp.eq.s32.totalorder %s20, 1
      %p127 = scmp.ne.s32.totalorder %s122, %s124
      %p128 = scmp.eq.s32.totalorder %s20, 0
      %p129 = por %p127, %p128
      %p130 = scmp.ne.s32.totalorder %s122, %s124
      %p131 = scmp.eq.s32.totalorder %s25, 1
      %p132 = por %p130, %p131
      %p133 = scmp.ne.s32.totalorder %s124, %s125
      %p134 = scmp.eq.s32.totalorder %s25, 0
      %p135 = por %p133, %p134
      %p136 = scmp.ne.s32.totalorder %s124, %s125
      %p137 = scmp.eq.s32.totalorder %s26, 1
      %p138 = por %p136, %p137
      %p140 = scmp.ne.s32.totalorder %s125, %s139
      %p141 = scmp.eq.s32.totalorder %s26, 0
      %p142 = por %p140, %p141
      %s144 = sadd.s32 %s143, 1
      %p147 = scmp.eq.s32.totalorder %s20, 1
      %p148 = scmp.ne.s32.totalorder %s143, %s145
      %p149 = scmp.eq.s32.totalorder %s20, 0
      %p150 = por %p148, %p149
      %p151 = scmp.ne.s32.totalorder %s143, %s145
      %p152 = scmp.eq.s32.totalorder %s25, 1
      %p153 = por %p151, %p152
      %p154 = scmp.ne.s32.totalorder %s145, %s146
      %p155 = scmp.eq.s32.totalorder %s25, 0
      %p156 = por %p154, %p155
      %p157 = scmp.ne.s32.totalorder %s145, %s146
      %p158 = scmp.eq.s32.totalorder %s26, 1
      %p159 = por %p157, %p158
      %p161 = scmp.ne.s32.totalorder %s146, %s160
      %p162 = scmp.eq.s32.totalorder %s26, 0
      %p163 = por %p161, %p162
      %s165 = sadd.s32 %s164, 1
      %p168 = scmp.eq.s32.totalorder %s20, 1
      %p169 = scmp.ne.s32.totalorder %s164, %s166
      %p170 = scmp.eq.s32.totalorder %s20, 0
      %p171 = por %p169, %p170
      %p172 = scmp.ne.s32.totalorder %s164, %s166
      %p173 = scmp.eq.s32.totalorder %s25, 1
      %p174 = por %p172, %p173
      %p175 = scmp.ne.s32.totalorder %s166, %s167
      %p176 = scmp.eq.s32.totalorder %s25, 0
      %p177 = por %p175, %p176
      %p178 = scmp.ne.s32.totalorder %s166, %s167
      %p179 = scmp.eq.s32.totalorder %s26, 1
      %p180 = por %p178, %p179
      %p182 = scmp.ne.s32.totalorder %s167, %s181
      %p183 = scmp.eq.s32.totalorder %s26, 0
      %p184 = por %p182, %p183
      %s185 = ssub.s32 %s20, %s27
      %p186 = scmp.eq.s32.totalorder %s185, 0
      %s188 = sadd.s32 %s187, 1
      %s189 = scalar_select %p186, %s187, %s188
      %p192 = pneg %p186
      %p193 = scmp.eq.s32.totalorder %s20, 1
      %p194 = por %p192, %p193
      %p195 = scmp.ne.s32.totalorder %s187, %s190
      %p196 = scmp.eq.s32.totalorder %s20, 0
      %p197 = por %p195, %p196
      %p198 = scmp.ne.s32.totalorder %s187, %s190
      %p199 = scmp.eq.s32.totalorder %s25, 1
      %p200 = por %p198, %p199
      %p201 = scmp.ne.s32.totalorder %s190, %s191
      %p202 = scmp.eq.s32.totalorder %s25, 0
      %p203 = por %p201, %p202
      %p204 = scmp.ne.s32.totalorder %s190, %s191
      %p205 = scmp.eq.s32.totalorder %s26, 1
      %p206 = por %p204, %p205
      %p208 = scmp.ne.s32.totalorder %s191, %s207
      %p209 = scmp.eq.s32.totalorder %s26, 0
      %p210 = por %p208, %p209
      %p211 = scmp.le.s32.totalorder 1, %s20
      %p212 = scmp.lt.s32.totalorder %s20, 3
      %p213 = pnand %p211, %p212
      %p214 = pneg %p213
      // Predicated region
      $region9: #{tpu_custom_call.1} parent=5 // pred_check
        _
      $region10: #{tpu_custom_call.1} parent=5 // pred_check_branch
        %216 = sbr.rel (%p213) target = $region12
      $region11: #{tpu_custom_call.1} parent=5 // pred_region
        %s217 = ssub.s32 %s20, 1
        // Predicated region
        $region13: #{tpu_custom_call.1} parent=11 // pred_check
          %p218 = pneg %p93
        $region14: #{tpu_custom_call.1} parent=11 // pred_check_branch
          %220 = sbr.rel (%p218) target = $region16
        $region15: #{tpu_custom_call.1} parent=11 // pred_region
          _
        $region16: #{tpu_custom_call.1} parent=11 // pred_fallthru
          _
        // Predicated region
        $region17: #{tpu_custom_call.1} parent=11 // pred_check
          %p221 = pneg %p114
        $region18: #{tpu_custom_call.1} parent=11 // pred_check_branch
          %223 = sbr.rel (%p221) target = $region20
        $region19: #{tpu_custom_call.1} parent=11 // pred_region
          %s225 = ssub.s32 6144, 6144
          %226 = vsyncadd [#allocation8], %s225
          %s227 = sshll.u32 [#allocation7], 4
          %s228 = int_to_ptr.vmem [resolvable:$true] %s227
          %233 = dma.hbm_to_vmem [thread:$0]  %s3, 6144, %s228, [#allocation8], 64, 64, 4
        $region20: #{tpu_custom_call.1} parent=11 // pred_fallthru
          _
        // Predicated region
        $region21: #{tpu_custom_call.1} parent=11 // pred_check
          %p234 = pneg %p135
        $region22: #{tpu_custom_call.1} parent=11 // pred_check_branch
          %236 = sbr.rel (%p234) target = $region24
        $region23: #{tpu_custom_call.1} parent=11 // pred_region
          _
        $region24: #{tpu_custom_call.1} parent=11 // pred_fallthru
          _
        // Predicated region
        $region25: #{tpu_custom_call.1} parent=11 // pred_check
          %p237 = pneg %p156
        $region26: #{tpu_custom_call.1} parent=11 // pred_check_branch
          %239 = sbr.rel (%p237) target = $region28
        $region27: #{tpu_custom_call.1} parent=11 // pred_region
          %s241 = ssub.s32 3072, 3072
          %242 = vsyncadd [#allocation8], %s241
          %s243 = sshll.u32 [#allocation9], 4
          %s244 = int_to_ptr.vmem [resolvable:$true] %s243
          %249 = dma.hbm_to_vmem [thread:$0]  %s5, 3072, %s244, [#allocation8], 64, 64, 4
        $region28: #{tpu_custom_call.1} parent=11 // pred_fallthru
          _
        // Predicated region
        $region29: #{tpu_custom_call.1} parent=11 // pred_check
          %p250 = pneg %p177
        $region30: #{tpu_custom_call.1} parent=11 // pred_check_branch
          %252 = sbr.rel (%p250) target = $region32
        $region31: #{tpu_custom_call.1} parent=11 // pred_region
          _
        $region32: #{tpu_custom_call.1} parent=11 // pred_fallthru
          _
      $region12: #{tpu_custom_call.1} parent=5 // pred_fallthru
        _
      %p253 = scmp.lt.s32.totalorder %s20, 2
      // Predicated region
      $region33: #{tpu_custom_call.1} parent=5 // pred_check
        %p254 = pneg %p253
      $region34: #{tpu_custom_call.1} parent=5 // pred_check_branch
        %256 = sbr.rel (%p254) target = $region36
      $region35: #{tpu_custom_call.1} parent=5 // pred_region
        // Predicated region
        $region37: #{tpu_custom_call.1} parent=35 // pred_check
          %p257 = pneg %p40
        $region38: #{tpu_custom_call.1} parent=35 // pred_check_branch
          %259 = sbr.rel (%p257) target = $region40
        $region39: #{tpu_custom_call.1} parent=35 // pred_region
          %p260 = scmp.lt.s32.totalorder %s20, 1
          %s261 = scalar_select %p260, %s20, 1
          %s262 = smul.addr %s261, 8
          %s263 = scalar_lea.vmem %s0, %s262
        $region40: #{tpu_custom_call.1} parent=35 // pred_fallthru
          _
        // Predicated region
        $region41: #{tpu_custom_call.1} parent=35 // pred_check
          %p264 = pneg %p66
        $region42: #{tpu_custom_call.1} parent=35 // pred_check_branch
          %266 = sbr.rel (%p264) target = $region44
        $region43: #{tpu_custom_call.1} parent=35 // pred_region
          %s267 = sand.u32 %s56, 1
          %s268 = scalar_lea.sflag [#allocation5], %s267
          %s269 = sand.u32 %s56, 1
          %s270 = smul.addr %s269, 8
          %s271 = scalar_lea.vmem [#allocation4], %s270
          %s273 = ssub.s32 128, 128
          %274 = vsyncadd %s268, %s273
          %s275 = smul.addr %s20, 2
          %s276 = smul.addr %s275, 64
          %s277 = scalar_lea.hbm %s1, %s276
          %s278 = sshll.u32 %s271, 4
          %s279 = int_to_ptr.vmem [resolvable:$true] %s278
          %284 = dma.hbm_to_vmem [thread:$0]  %s277, 128, %s279, %s268, 64, 64, 4
        $region44: #{tpu_custom_call.1} parent=35 // pred_fallthru
          _
      $region36: #{tpu_custom_call.1} parent=5 // pred_fallthru
        _
      %p285 = scmp.le.s32.totalorder 1, %s20
      %p286 = scmp.lt.s32.totalorder %s20, 3
      %p287 = pnand %p285, %p286
      %p288 = pneg %p287
      // Predicated region
      $region45: #{tpu_custom_call.1} parent=5 // pred_check
        _
      $region46: #{tpu_custom_call.1} parent=5 // pred_check_branch
        %290 = sbr.rel (%p287) target = $region48
      $region47: #{tpu_custom_call.1} parent=5 // pred_region
        %s291 = ssub.s32 %s20, 1
        %s292 = sand.u32 %s59, 1
        %s293 = scalar_lea.sflag [#allocation5], %s292
        %s294 = sand.u32 %s59, 1
        %s295 = smul.addr %s294, 8
        %s296 = scalar_lea.vmem [#allocation4], %s295
        // Predicated region
        $region49: #{tpu_custom_call.1} parent=47 // pred_check
          %p297 = pneg %p72
        $region50: #{tpu_custom_call.1} parent=47 // pred_check_branch
          %299 = sbr.rel (%p297) target = $region52
        $region51: #{tpu_custom_call.1} parent=47 // pred_region
          %300 = dma.done %s293, 128
        $region52: #{tpu_custom_call.1} parent=47 // pred_fallthru
          _
        // Predicated region
        $region53: #{tpu_custom_call.1} parent=47 // pred_check
          %p301 = pneg %p114
        $region54: #{tpu_custom_call.1} parent=47 // pred_check_branch
          %303 = sbr.rel (%p301) target = $region56
        $region55: #{tpu_custom_call.1} parent=47 // pred_region
          %304 = dma.done [#allocation8], 6144
        $region56: #{tpu_custom_call.1} parent=47 // pred_fallthru
          _
        // Predicated region
        $region57: #{tpu_custom_call.1} parent=47 // pred_check
          %p305 = pneg %p156
        $region58: #{tpu_custom_call.1} parent=47 // pred_check_branch
          %307 = sbr.rel (%p305) target = $region60
        $region59: #{tpu_custom_call.1} parent=47 // pred_region
          %308 = dma.done [#allocation8], 3072
        $region60: #{tpu_custom_call.1} parent=47 // pred_fallthru
          _
        %p309 = scmp.lt.s32.totalorder %s25, 1
        %s310 = scalar_select %p309, %s25, 1
        %s311 = smul.addr %s310, 8
        %s312 = scalar_lea.vmem %s0, %s311
        %p313 = pneg %p46
        %p314 = pneg %p43
        %s315 = sand.u32 %s59, 1
        %s316 = scalar_lea.sflag [#allocation5], %s315
        %s317 = sand.u32 %s59, 1
        %s318 = smul.addr %s317, 8
        %s319 = scalar_lea.vmem [#allocation4], %s318
        %p320 = pneg %p72
        %p321 = pneg %p69
        %p322 = pneg %p93
        %p323 = pneg %p90
        %p324 = pneg %p114
        %p325 = pneg %p111
        %p326 = pneg %p135
        %p327 = pneg %p132
        %p328 = pneg %p156
        %p329 = pneg %p153
        %p330 = pneg %p177
        %p331 = pneg %p174
        %p332 = pneg %p203
        %p333 = pneg %p200
        %s334 = sand.u32 %s190, 1
        %s335 = scalar_lea.sflag [#allocation6], %s334
        %s336 = sand.u32 %s190, 1
        %s337 = smul.addr %s336, 16
        %s338 = scalar_lea.vmem [#allocation10], %s337
        %p339 = scmp.lt.s32.totalorder %s25, 1
        %s340 = scalar_select %p339, %s25, 1
        %s341 = smul.addr %s340, 8
        %s342 = scalar_lea.vmem %s0, %s341
        %v344 = vld [vmem:[%s2] sm:$0xff]
        %v345 = vld [vmem:[%s2 + $0x8] sm:$0xff]
        %v346 = vld [vmem:[%s342] sm:$0xff]
        %vm347 = vcmask 64512
        %v349 = vsel %vm347, %v344, 0
        %v352 = vsel %vm347, %v345, 0
        %354 = vmatprep.subr.mxu0 0.0
        %355 = vmatpush1.msra.mxu0 0.0
        %356 = vmatprep.subr.mxu0 0.0
        %357 = vmatpush1.msra.mxu0 0.0
        %358 = vmatprep.subr.mxu0 0.0
        %359 = vmatpush1.msra.mxu0 0.0
        %360 = vmatprep.subr.mxu0 0.0
        %361 = vmatpush1.msra.mxu0 0.0
        %362 = vmatprep.subr.mxu0 0.0
        %363 = vmatpush1.msra.mxu0 0.0
        %364 = vmatprep.subr.mxu0 0.0
        %365 = vmatpush1.msra.mxu0 0.0
        %366 = vmatprep.subr.mxu0 0.0
        %367 = vmatpush1.msra.mxu0 0.0
        %368 = vmatprep.subr.mxu0 0.0
        %369 = vmatpush1.msra.mxu0 0.0
        %370 = vmatprep.subr.mxu0 0.0
        %371 = vmatpush1.msra.mxu0 0.0
        %372 = vmatprep.subr.mxu0 0.0
        %373 = vmatpush1.msra.mxu0 0.0
        %374 = vmatprep.subr.mxu0 0.0
        %375 = vmatpush1.msra.mxu0 0.0
        %376 = vmatprep.subr.mxu0 0.0
        %377 = vmatpush1.msra.mxu0 0.0
        %378 = vmatprep.subr.mxu0 0.0
        %379 = vmatpush1.msra.mxu0 0.0
        %380 = vmatprep.subr.mxu0 0.0
        %381 = vmatpush1.msra.mxu0 0.0
        %382 = vmatprep.subr.mxu0 0.0
        %383 = vmatpush1.msra.mxu0 0.0
        %384 = vmatprep.subr.mxu0 0.0
        %385 = vmatpush1.msra.mxu0 %v346
        %386 = vmatprep.subr.mxu0 0.0
        %387 = vmatpush2.msra.mxu0 0.0
        %388 = vmatprep.subr.mxu0 0.0
        %389 = vmatpush2.msra.mxu0 0.0
        %390 = vmatprep.subr.mxu0 0.0
        %391 = vmatpush2.msra.mxu0 0.0
        %392 = vmatprep.subr.mxu0 0.0
        %393 = vmatpush2.msra.mxu0 0.0
        %394 = vmatprep.subr.mxu0 0.0
        %395 = vmatpush2.msra.mxu0 0.0
        %396 = vmatprep.subr.mxu0 0.0
        %397 = vmatpush2.msra.mxu0 0.0
        %398 = vmatprep.subr.mxu0 0.0
        %399 = vmatpush2.msra.mxu0 0.0
        %400 = vmatprep.subr.mxu0 0.0
        %401 = vmatpush2.msra.mxu0 0.0
        %402 = vmatprep.subr.mxu0 0.0
        %403 = vmatpush2.msra.mxu0 0.0
        %404 = vmatprep.subr.mxu0 0.0
        %405 = vmatpush2.msra.mxu0 0.0
        %406 = vmatprep.subr.mxu0 0.0
        %407 = vmatpush2.msra.mxu0 0.0
        %408 = vmatprep.subr.mxu0 0.0
        %409 = vmatpush2.msra.mxu0 0.0
        %410 = vmatprep.subr.mxu0 0.0
        %411 = vmatpush2.msra.mxu0 0.0
        %412 = vmatprep.subr.mxu0 0.0
        %413 = vmatpush2.msra.mxu0 0.0
        %414 = vmatprep.subr.mxu0 0.0
        %415 = vmatpush2.msra.mxu0 0.0
        %416 = vmatprep.subr.mxu0 0.0
        %417 = vmatpush2.msra.mxu0 0.0
        %418 = vmatprep.mubr.f32.mxu0 0.0
        %419 = vmatmul.mubr.f32.gmra.mxu0 %v349
        %v420 = vpop.f32.mrf.mxu0
        %v421 = vadd.f32 0.0, %v420
        %v422 = vpop.f32.mrf.mxu0
        %423 = vmatprep.mubr.f32.mxu0 0.0
        %424 = vmatmul.mubr.f32.gmra.mxu0 %v352
        %v425 = vpop.f32.mrf.mxu0
        %v426 = vadd.f32 0.0, %v425
        %v427 = vpop.f32.mrf.mxu0
        %428 = vdwg.mxu0
        %v429 = vlaneseq
        %vm430 = vcmp.ge.s32.totalorder %v429, 0
        %vm431 = vcmp.lt.s32.totalorder %v429, 256
        %vm432 = vmand %vm430, %vm431
        %433 = vst.msk [vmem:[#allocation2] ss:$8 sm:$0x3] %vm432, 0.0
        %434 = vst.msk [vmem:[#allocation2] ss:$8 sm:$0x0] %vm432, 0.0
        %s435 = scalar_lea.vmem [#allocation2], 33
        %436 = vst.msk [vmem:[%s435] ss:$8 sm:$0x3] %vm432, 0.0
        %437 = vst.msk [vmem:[%s435] ss:$8 sm:$0x0] %vm432, 0.0
        %vm440 = vcmask 1040384
        %v441 = vrot.slane %v421, 7
        %v442 = vrot.slane %v426, 7
        %v443 = vsel %vm440, %v441, %v442
        %447 = vst [vmem:[#allocation2] sm:$0xfe] %v441
        %448 = vst [vmem:[#allocation2 + $0x10] sm:$0xff] %v443
        %449 = vst [vmem:[#allocation2 + $0x20] sm:$0x1] %v442
        %v450 = vld [vmem:[%s296] sm:$0xf]
        %v451 = vld [vmem:[%s296 + $0x4] sm:$0xf]
        %v452 = vunpack.c.l.bf16 %v450
        %v453 = vunpack.c.l.bf16 %v451
        %v456 = vrot.slane %v452, 7
        %v457 = vrot.slane %v453, 7
        %v458 = vsel %vm440, %v456, %v457
        %462 = vst [vmem:[#allocation2 + $0x8] sm:$0xfe] %v456
        %463 = vst [vmem:[#allocation2 + $0x18] sm:$0xff] %v458
        %464 = vst [vmem:[#allocation2 + $0x28] sm:$0x1] %v457
        %v465 = vld [vmem:[#allocation2] sm:$0xff]
        %v466 = vld [vmem:[#allocation2 + $0x8] sm:$0xff]
        %v467 = vld [vmem:[#allocation2 + $0x10] sm:$0xff]
        %v468 = vld [vmem:[#allocation2 + $0x18] sm:$0xff]
        %v469 = vpack.c.bf16 %v467, %v465
        %v470 = vpack.c.bf16 %v468, %v466
        %v471 = vld [vmem:[#allocation7] sm:$0xf]
        %v472 = vld [vmem:[#allocation7 + $0x4] sm:$0xf]
        %v473 = vld [vmem:[#allocation7 + $0x8] sm:$0xf]
        %v474 = vld [vmem:[#allocation7 + $0xc] sm:$0xf]
        %v475 = vld [vmem:[#allocation7 + $0x10] sm:$0xf]
        %v476 = vld [vmem:[#allocation7 + $0x14] sm:$0xf]
        %v477 = vld [vmem:[#allocation7 + $0x18] sm:$0xf]
        %v478 = vld [vmem:[#allocation7 + $0x1c] sm:$0xf]
        %v479 = vld [vmem:[#allocation7 + $0x20] sm:$0xf]
        %v480 = vld [vmem:[#allocation7 + $0x24] sm:$0xf]
        %v481 = vld [vmem:[#allocation7 + $0x28] sm:$0xf]
        %v482 = vld [vmem:[#allocation7 + $0x2c] sm:$0xf]
        %v483 = vld [vmem:[#allocation7 + $0x30] sm:$0xf]
        %v484 = vld [vmem:[#allocation7 + $0x34] sm:$0xf]
        %v485 = vld [vmem:[#allocation7 + $0x38] sm:$0xf]
        %v486 = vld [vmem:[#allocation7 + $0x3c] sm:$0xf]
        %v487 = vld [vmem:[#allocation7 + $0x40] sm:$0xf]
        %v488 = vld [vmem:[#allocation7 + $0x44] sm:$0xf]
        %v489 = vld [vmem:[#allocation7 + $0x48] sm:$0xf]
        %v490 = vld [vmem:[#allocation7 + $0x4c] sm:$0xf]
        %v491 = vld [vmem:[#allocation7 + $0x50] sm:$0xf]
        %v492 = vld [vmem:[#allocation7 + $0x54] sm:$0xf]
        %v493 = vld [vmem:[#allocation7 + $0x58] sm:$0xf]
        %v494 = vld [vmem:[#allocation7 + $0x5c] sm:$0xf]
        %v495 = vld [vmem:[#allocation7 + $0x60] sm:$0xf]
        %v496 = vld [vmem:[#allocation7 + $0x64] sm:$0xf]
        %v497 = vld [vmem:[#allocation7 + $0x68] sm:$0xf]
        %v498 = vld [vmem:[#allocation7 + $0x6c] sm:$0xf]
        %v499 = vld [vmem:[#allocation7 + $0x70] sm:$0xf]
        %v500 = vld [vmem:[#allocation7 + $0x74] sm:$0xf]
        %v501 = vld [vmem:[#allocation7 + $0x78] sm:$0xf]
        %v502 = vld [vmem:[#allocation7 + $0x7c] sm:$0xf]
        %v503 = vld [vmem:[#allocation2] sm:$0xfe]
        %v504 = vld [vmem:[#allocation2 + $0x8] sm:$0xfe]
        %v505 = vld [vmem:[#allocation2 + $0x20] sm:$0x1]
        %v506 = vld [vmem:[#allocation2 + $0x28] sm:$0x1]
        %v507 = vpack.c.bf16 %v467, %v503
        %v508 = vpack.c.bf16 %v468, %v504
        %v509 = vpack.c.bf16 %v505, %v505
        %v510 = vpack.c.bf16 %v506, %v506
        %s511 = scalar_lea.vmem [#allocation7], 128
        %v512 = vld [vmem:[%s511] sm:$0xf]
        %v513 = vld [vmem:[%s511 + $0x4] sm:$0xf]
        %v514 = vld [vmem:[%s511 + $0x8] sm:$0xf]
        %v515 = vld [vmem:[%s511 + $0xc] sm:$0xf]
        %v516 = vld [vmem:[%s511 + $0x10] sm:$0xf]
        %v517 = vld [vmem:[%s511 + $0x14] sm:$0xf]
        %v518 = vld [vmem:[%s511 + $0x18] sm:$0xf]
        %v519 = vld [vmem:[%s511 + $0x1c] sm:$0xf]
        %v520 = vld [vmem:[%s511 + $0x20] sm:$0xf]
        %v521 = vld [vmem:[%s511 + $0x24] sm:$0xf]
        %v522 = vld [vmem:[%s511 + $0x28] sm:$0xf]
        %v523 = vld [vmem:[%s511 + $0x2c] sm:$0xf]
        %v524 = vld [vmem:[%s511 + $0x30] sm:$0xf]
        %v525 = vld [vmem:[%s511 + $0x34] sm:$0xf]
        %v526 = vld [vmem:[%s511 + $0x38] sm:$0xf]
        %v527 = vld [vmem:[%s511 + $0x3c] sm:$0xf]
        %v528 = vld [vmem:[%s511 + $0x40] sm:$0xf]
        %v529 = vld [vmem:[%s511 + $0x44] sm:$0xf]
        %v530 = vld [vmem:[%s511 + $0x48] sm:$0xf]
        %v531 = vld [vmem:[%s511 + $0x4c] sm:$0xf]
        %v532 = vld [vmem:[%s511 + $0x50] sm:$0xf]
        %v533 = vld [vmem:[%s511 + $0x54] sm:$0xf]
        %v534 = vld [vmem:[%s511 + $0x58] sm:$0xf]
        %v535 = vld [vmem:[%s511 + $0x5c] sm:$0xf]
        %v536 = vld [vmem:[%s511 + $0x60] sm:$0xf]
        %v537 = vld [vmem:[%s511 + $0x64] sm:$0xf]
        %v538 = vld [vmem:[%s511 + $0x68] sm:$0xf]
        %v539 = vld [vmem:[%s511 + $0x6c] sm:$0xf]
        %v540 = vld [vmem:[%s511 + $0x70] sm:$0xf]
        %v541 = vld [vmem:[%s511 + $0x74] sm:$0xf]
        %v542 = vld [vmem:[%s511 + $0x78] sm:$0xf]
        %v543 = vld [vmem:[%s511 + $0x7c] sm:$0xf]
        %vm544 = vsmask.f32 7424
        %v546 = vshrl.u32 %v507, 16
        %v548 = vshll.u32 %v507, 16
        %v550 = vrot.slane %v548, 1
        %v551 = vor.u32 %v546, %v550
        %v553 = vshll.u32 %v509, 16
        %v555 = vrot.slane %v553, 1
        %v556 = vsel %vm544, %v551, %v555
        %v558 = vshrl.u32 %v508, 16
        %v560 = vshll.u32 %v508, 16
        %v562 = vrot.slane %v560, 1
        %v563 = vor.u32 %v558, %v562
        %v565 = vshll.u32 %v510, 16
        %v567 = vrot.slane %v565, 1
        %v568 = vsel %vm544, %v563, %v567
        %v603 = vunpack.c.l.b16 %v512
        %v604 = vunpack.c.l.b16 %v513
        %v605 = vunpack.c.l.b16 %v514
        %v606 = vunpack.c.l.b16 %v515
        %v607 = vunpack.c.l.b16 %v516
        %v608 = vunpack.c.l.b16 %v517
        %v609 = vunpack.c.l.b16 %v518
        %v610 = vunpack.c.l.b16 %v519
        %v611 = vunpack.c.l.b16 %v520
        %v612 = vunpack.c.l.b16 %v521
        %v613 = vunpack.c.l.b16 %v522
        %v614 = vunpack.c.l.b16 %v523
        %v615 = vunpack.c.l.b16 %v524
        %v616 = vunpack.c.l.b16 %v525
        %v617 = vunpack.c.l.b16 %v526
        %v618 = vunpack.c.l.b16 %v527
        %v619 = vunpack.c.l.b16 %v528
        %v620 = vunpack.c.l.b16 %v529
        %v621 = vunpack.c.l.b16 %v530
        %v622 = vunpack.c.l.b16 %v531
        %v623 = vunpack.c.l.b16 %v532
        %v624 = vunpack.c.l.b16 %v533
        %v625 = vunpack.c.l.b16 %v534
        %v626 = vunpack.c.l.b16 %v535
        %v627 = vunpack.c.l.b16 %v536
        %v628 = vunpack.c.l.b16 %v537
        %v629 = vunpack.c.l.b16 %v538
        %v630 = vunpack.c.l.b16 %v539
        %v631 = vunpack.c.l.b16 %v540
        %v632 = vunpack.c.l.b16 %v541
        %v633 = vunpack.c.l.b16 %v542
        %v634 = vunpack.c.l.b16 %v543
        %v635 = vpack.c.b16 %v604, %v603
        %v636 = vpack.c.b16 %v606, %v605
        %v637 = vpack.c.b16 %v608, %v607
        %v638 = vpack.c.b16 %v610, %v609
        %v639 = vpack.c.b16 %v612, %v611
        %v640 = vpack.c.b16 %v614, %v613
        %v641 = vpack.c.b16 %v616, %v615
        %v642 = vpack.c.b16 %v618, %v617
        %v643 = vpack.c.b16 %v620, %v619
        %v644 = vpack.c.b16 %v622, %v621
        %v645 = vpack.c.b16 %v624, %v623
        %v646 = vpack.c.b16 %v626, %v625
        %v647 = vpack.c.b16 %v628, %v627
        %v648 = vpack.c.b16 %v630, %v629
        %v649 = vpack.c.b16 %v632, %v631
        %v650 = vpack.c.b16 %v634, %v633
        %667 = vmatprep.subr.bf16.mxu0 0
        %668 = vmatpush1.bf16.msra.mxu0 %v642
        %669 = vmatprep.subr.bf16.mxu0 0
        %670 = vmatpush1.bf16.msra.mxu0 %v641
        %671 = vmatprep.subr.bf16.mxu0 0
        %672 = vmatpush1.bf16.msra.mxu0 %v640
        %673 = vmatprep.subr.bf16.mxu0 0
        %674 = vmatpush1.bf16.msra.mxu0 %v639
        %675 = vmatprep.subr.bf16.mxu0 0
        %676 = vmatpush1.bf16.msra.mxu0 %v638
        %677 = vmatprep.subr.bf16.mxu0 0
        %678 = vmatpush1.bf16.msra.mxu0 %v637
        %679 = vmatprep.subr.bf16.mxu0 0
        %680 = vmatpush1.bf16.msra.mxu0 %v636
        %681 = vmatprep.subr.bf16.mxu0 0
        %682 = vmatpush1.bf16.msra.mxu0 %v635
        %683 = vmatprep.subr.bf16.mxu0 0
        %684 = vmatpush2.bf16.msra.mxu0 %v650
        %685 = vmatprep.subr.bf16.mxu0 0
        %686 = vmatpush2.bf16.msra.mxu0 %v649
        %687 = vmatprep.subr.bf16.mxu0 0
        %688 = vmatpush2.bf16.msra.mxu0 %v648
        %689 = vmatprep.subr.bf16.mxu0 0
        %690 = vmatpush2.bf16.msra.mxu0 %v647
        %691 = vmatprep.subr.bf16.mxu0 0
        %692 = vmatpush2.bf16.msra.mxu0 %v646
        %693 = vmatprep.subr.bf16.mxu0 0
        %694 = vmatpush2.bf16.msra.mxu0 %v645
        %695 = vmatprep.subr.bf16.mxu0 0
        %696 = vmatpush2.bf16.msra.mxu0 %v644
        %697 = vmatprep.subr.bf16.mxu0 0
        %698 = vmatpush2.bf16.msra.mxu0 %v643
        %699 = vmatprep.mubr.bf16.mxu0 %v568
        %700 = vmatmul.mubr.bf16.gmra.mxu0 %v556
        %v701 = vpop.f32.mrf.mxu0
        %v702 = vadd.f32 0.0, %v701
        %v703 = vpop.f32.mrf.mxu0
        %v704 = vpop.f32.mrf.mxu0
        %v705 = vadd.f32 0.0, %v704
        %v706 = vpop.f32.mrf.mxu0
        %707 = vdwg.mxu0
        %v740 = vunpack.c.l.b16 %v471
        %v741 = vunpack.c.l.b16 %v472
        %v742 = vunpack.c.l.b16 %v473
        %v743 = vunpack.c.l.b16 %v474
        %v744 = vunpack.c.l.b16 %v475
        %v745 = vunpack.c.l.b16 %v476
        %v746 = vunpack.c.l.b16 %v477
        %v747 = vunpack.c.l.b16 %v478
        %v748 = vunpack.c.l.b16 %v479
        %v749 = vunpack.c.l.b16 %v480
        %v750 = vunpack.c.l.b16 %v481
        %v751 = vunpack.c.l.b16 %v482
        %v752 = vunpack.c.l.b16 %v483
        %v753 = vunpack.c.l.b16 %v484
        %v754 = vunpack.c.l.b16 %v485
        %v755 = vunpack.c.l.b16 %v486
        %v756 = vunpack.c.l.b16 %v487
        %v757 = vunpack.c.l.b16 %v488
        %v758 = vunpack.c.l.b16 %v489
        %v759 = vunpack.c.l.b16 %v490
        %v760 = vunpack.c.l.b16 %v491
        %v761 = vunpack.c.l.b16 %v492
        %v762 = vunpack.c.l.b16 %v493
        %v763 = vunpack.c.l.b16 %v494
        %v764 = vunpack.c.l.b16 %v495
        %v765 = vunpack.c.l.b16 %v496
        %v766 = vunpack.c.l.b16 %v497
        %v767 = vunpack.c.l.b16 %v498
        %v768 = vunpack.c.l.b16 %v499
        %v769 = vunpack.c.l.b16 %v500
        %v770 = vunpack.c.l.b16 %v501
        %v771 = vunpack.c.l.b16 %v502
        %v772 = vpack.c.b16 %v741, %v740
        %v773 = vpack.c.b16 %v743, %v742
        %v774 = vpack.c.b16 %v745, %v744
        %v775 = vpack.c.b16 %v747, %v746
        %v776 = vpack.c.b16 %v749, %v748
        %v777 = vpack.c.b16 %v751, %v750
        %v778 = vpack.c.b16 %v753, %v752
        %v779 = vpack.c.b16 %v755, %v754
        %v780 = vpack.c.b16 %v757, %v756
        %v781 = vpack.c.b16 %v759, %v758
        %v782 = vpack.c.b16 %v761, %v760
        %v783 = vpack.c.b16 %v763, %v762
        %v784 = vpack.c.b16 %v765, %v764
        %v785 = vpack.c.b16 %v767, %v766
        %v786 = vpack.c.b16 %v769, %v768
        %v787 = vpack.c.b16 %v771, %v770
        %804 = vmatprep.subr.bf16.mxu0 0
        %805 = vmatpush1.bf16.msra.mxu0 %v779
        %806 = vmatprep.subr.bf16.mxu0 0
        %807 = vmatpush1.bf16.msra.mxu0 %v778
        %808 = vmatprep.subr.bf16.mxu0 0
        %809 = vmatpush1.bf16.msra.mxu0 %v777
        %810 = vmatprep.subr.bf16.mxu0 0
        %811 = vmatpush1.bf16.msra.mxu0 %v776
        %812 = vmatprep.subr.bf16.mxu0 0
        %813 = vmatpush1.bf16.msra.mxu0 %v775
        %814 = vmatprep.subr.bf16.mxu0 0
        %815 = vmatpush1.bf16.msra.mxu0 %v774
        %816 = vmatprep.subr.bf16.mxu0 0
        %817 = vmatpush1.bf16.msra.mxu0 %v773
        %818 = vmatprep.subr.bf16.mxu0 0
        %819 = vmatpush1.bf16.msra.mxu0 %v772
        %820 = vmatprep.subr.bf16.mxu0 0
        %821 = vmatpush2.bf16.msra.mxu0 %v787
        %822 = vmatprep.subr.bf16.mxu0 0
        %823 = vmatpush2.bf16.msra.mxu0 %v786
        %824 = vmatprep.subr.bf16.mxu0 0
        %825 = vmatpush2.bf16.msra.mxu0 %v785
        %826 = vmatprep.subr.bf16.mxu0 0
        %827 = vmatpush2.bf16.msra.mxu0 %v784
        %828 = vmatprep.subr.bf16.mxu0 0
        %829 = vmatpush2.bf16.msra.mxu0 %v783
        %830 = vmatprep.subr.bf16.mxu0 0
        %831 = vmatpush2.bf16.msra.mxu0 %v782
        %832 = vmatprep.subr.bf16.mxu0 0
        %833 = vmatpush2.bf16.msra.mxu0 %v781
        %834 = vmatprep.subr.bf16.mxu0 0
        %835 = vmatpush2.bf16.msra.mxu0 %v780
        %836 = vmatprep.mubr.bf16.mxu0 %v470
        %837 = vmatmul.mubr.bf16.gmra.mxu0 %v469
        %v838 = vpop.f32.mrf.mxu0
        %v839 = vadd.f32 %v702, %v838
        %v840 = vpop.f32.mrf.mxu0
        %v841 = vpop.f32.mrf.mxu0
        %v842 = vadd.f32 %v705, %v841
        %v843 = vpop.f32.mrf.mxu0
        %844 = vdwg.mxu0
        %v845 = vld [vmem:[#allocation2] sm:$0xfc]
        %v846 = vld [vmem:[#allocation2 + $0x8] sm:$0xfc]
        %v847 = vld [vmem:[#allocation2 + $0x20] sm:$0x3]
        %v848 = vld [vmem:[#allocation2 + $0x28] sm:$0x3]
        %v849 = vpack.c.bf16 %v467, %v845
        %v850 = vpack.c.bf16 %v468, %v846
        %v851 = vpack.c.bf16 %v847, %v847
        %v852 = vpack.c.bf16 %v848, %v848
        %s853 = scalar_lea.vmem [#allocation7], 256
        %v854 = vld [vmem:[%s853] sm:$0xf]
        %v855 = vld [vmem:[%s853 + $0x4] sm:$0xf]
        %v856 = vld [vmem:[%s853 + $0x8] sm:$0xf]
        %v857 = vld [vmem:[%s853 + $0xc] sm:$0xf]
        %v858 = vld [vmem:[%s853 + $0x10] sm:$0xf]
        %v859 = vld [vmem:[%s853 + $0x14] sm:$0xf]
        %v860 = vld [vmem:[%s853 + $0x18] sm:$0xf]
        %v861 = vld [vmem:[%s853 + $0x1c] sm:$0xf]
        %v862 = vld [vmem:[%s853 + $0x20] sm:$0xf]
        %v863 = vld [vmem:[%s853 + $0x24] sm:$0xf]
        %v864 = vld [vmem:[%s853 + $0x28] sm:$0xf]
        %v865 = vld [vmem:[%s853 + $0x2c] sm:$0xf]
        %v866 = vld [vmem:[%s853 + $0x30] sm:$0xf]
        %v867 = vld [vmem:[%s853 + $0x34] sm:$0xf]
        %v868 = vld [vmem:[%s853 + $0x38] sm:$0xf]
        %v869 = vld [vmem:[%s853 + $0x3c] sm:$0xf]
        %v870 = vld [vmem:[%s853 + $0x40] sm:$0xf]
        %v871 = vld [vmem:[%s853 + $0x44] sm:$0xf]
        %v872 = vld [vmem:[%s853 + $0x48] sm:$0xf]
        %v873 = vld [vmem:[%s853 + $0x4c] sm:$0xf]
        %v874 = vld [vmem:[%s853 + $0x50] sm:$0xf]
        %v875 = vld [vmem:[%s853 + $0x54] sm:$0xf]
        %v876 = vld [vmem:[%s853 + $0x58] sm:$0xf]
        %v877 = vld [vmem:[%s853 + $0x5c] sm:$0xf]
        %v878 = vld [vmem:[%s853 + $0x60] sm:$0xf]
        %v879 = vld [vmem:[%s853 + $0x64] sm:$0xf]
        %v880 = vld [vmem:[%s853 + $0x68] sm:$0xf]
        %v881 = vld [vmem:[%s853 + $0x6c] sm:$0xf]
        %v882 = vld [vmem:[%s853 + $0x70] sm:$0xf]
        %v883 = vld [vmem:[%s853 + $0x74] sm:$0xf]
        %v884 = vld [vmem:[%s853 + $0x78] sm:$0xf]
        %v885 = vld [vmem:[%s853 + $0x7c] sm:$0xf]
        %vm890 = vcmask 1046528
        %v891 = vrot.slane %v849, 1
        %v892 = vrot.slane %v851, 1
        %v893 = vsel %vm890, %v891, %v892
        %v894 = vrot.slane %v850, 1
        %v895 = vrot.slane %v852, 1
        %v896 = vsel %vm890, %v894, %v895
        %v931 = vunpack.c.l.b16 %v854
        %v932 = vunpack.c.l.b16 %v855
        %v933 = vunpack.c.l.b16 %v856
        %v934 = vunpack.c.l.b16 %v857
        %v935 = vunpack.c.l.b16 %v858
        %v936 = vunpack.c.l.b16 %v859
        %v937 = vunpack.c.l.b16 %v860
        %v938 = vunpack.c.l.b16 %v861
        %v939 = vunpack.c.l.b16 %v862
        %v940 = vunpack.c.l.b16 %v863
        %v941 = vunpack.c.l.b16 %v864
        %v942 = vunpack.c.l.b16 %v865
        %v943 = vunpack.c.l.b16 %v866
        %v944 = vunpack.c.l.b16 %v867
        %v945 = vunpack.c.l.b16 %v868
        %v946 = vunpack.c.l.b16 %v869
        %v947 = vunpack.c.l.b16 %v870
        %v948 = vunpack.c.l.b16 %v871
        %v949 = vunpack.c.l.b16 %v872
        %v950 = vunpack.c.l.b16 %v873
        %v951 = vunpack.c.l.b16 %v874
        %v952 = vunpack.c.l.b16 %v875
        %v953 = vunpack.c.l.b16 %v876
        %v954 = vunpack.c.l.b16 %v877
        %v955 = vunpack.c.l.b16 %v878
        %v956 = vunpack.c.l.b16 %v879
        %v957 = vunpack.c.l.b16 %v880
        %v958 = vunpack.c.l.b16 %v881
        %v959 = vunpack.c.l.b16 %v882
        %v960 = vunpack.c.l.b16 %v883
        %v961 = vunpack.c.l.b16 %v884
        %v962 = vunpack.c.l.b16 %v885
        %v963 = vpack.c.b16 %v932, %v931
        %v964 = vpack.c.b16 %v934, %v933
        %v965 = vpack.c.b16 %v936, %v935
        %v966 = vpack.c.b16 %v938, %v937
        %v967 = vpack.c.b16 %v940, %v939
        %v968 = vpack.c.b16 %v942, %v941
        %v969 = vpack.c.b16 %v944, %v943
        %v970 = vpack.c.b16 %v946, %v945
        %v971 = vpack.c.b16 %v948, %v947
        %v972 = vpack.c.b16 %v950, %v949
        %v973 = vpack.c.b16 %v952, %v951
        %v974 = vpack.c.b16 %v954, %v953
        %v975 = vpack.c.b16 %v956, %v955
        %v976 = vpack.c.b16 %v958, %v957
        %v977 = vpack.c.b16 %v960, %v959
        %v978 = vpack.c.b16 %v962, %v961
        %995 = vmatprep.subr.bf16.mxu0 0
        %996 = vmatpush1.bf16.msra.mxu0 %v970
        %997 = vmatprep.subr.bf16.mxu0 0
        %998 = vmatpush1.bf16.msra.mxu0 %v969
        %999 = vmatprep.subr.bf16.mxu0 0
        %1000 = vmatpush1.bf16.msra.mxu0 %v968
        %1001 = vmatprep.subr.bf16.mxu0 0
        %1002 = vmatpush1.bf16.msra.mxu0 %v967
        %1003 = vmatprep.subr.bf16.mxu0 0
        %1004 = vmatpush1.bf16.msra.mxu0 %v966
        %1005 = vmatprep.subr.bf16.mxu0 0
        %1006 = vmatpush1.bf16.msra.mxu0 %v965
        %1007 = vmatprep.subr.bf16.mxu0 0
        %1008 = vmatpush1.bf16.msra.mxu0 %v964
        %1009 = vmatprep.subr.bf16.mxu0 0
        %1010 = vmatpush1.bf16.msra.mxu0 %v963
        %1011 = vmatprep.subr.bf16.mxu0 0
        %1012 = vmatpush2.bf16.msra.mxu0 %v978
        %1013 = vmatprep.subr.bf16.mxu0 0
        %1014 = vmatpush2.bf16.msra.mxu0 %v977
        %1015 = vmatprep.subr.bf16.mxu0 0
        %1016 = vmatpush2.bf16.msra.mxu0 %v976
        %1017 = vmatprep.subr.bf16.mxu0 0
        %1018 = vmatpush2.bf16.msra.mxu0 %v975
        %1019 = vmatprep.subr.bf16.mxu0 0
        %1020 = vmatpush2.bf16.msra.mxu0 %v974
        %1021 = vmatprep.subr.bf16.mxu0 0
        %1022 = vmatpush2.bf16.msra.mxu0 %v973
        %1023 = vmatprep.subr.bf16.mxu0 0
        %1024 = vmatpush2.bf16.msra.mxu0 %v972
        %1025 = vmatprep.subr.bf16.mxu0 0
        %1026 = vmatpush2.bf16.msra.mxu0 %v971
        %1027 = vmatprep.mubr.bf16.mxu0 %v896
        %1028 = vmatmul.mubr.bf16.gmra.mxu0 %v893
        %v1029 = vpop.f32.mrf.mxu0
        %v1030 = vadd.f32 0.0, %v1029
        %v1031 = vpop.f32.mrf.mxu0
        %v1032 = vpop.f32.mrf.mxu0
        %v1033 = vadd.f32 0.0, %v1032
        %v1034 = vpop.f32.mrf.mxu0
        %1035 = vdwg.mxu0
        %v1036 = vadd.f32 %v839, %v1030
        %v1037 = vadd.f32 %v842, %v1033
        %v1038 = vld [vmem:[%s4] sm:$0x1]
        %v1040 = vlaneseq
        %v1041 = vshrl.u32 %v1040, 7
        %v1042 = vsub.s32 0, %v1041
        %v1043 = vrot.slane %v1038, %v1042
        %v1045 = vadd.f32 %v1036, %v1043
        %v1046 = vadd.f32 %v1037, %v1043
        %v1047 = vmax.f32 %v1045, 0.0
        %v1048 = vmax.f32 %v1046, 0.0
        %1049 = vst [vmem:[#allocation3] sm:$0x1] 0.0
        %1050 = vst [vmem:[#allocation3 + $0x11] sm:$0x1] 0.0
        %1051 = vst [vmem:[#allocation3 + $0x1] sm:$0xff] %v1047
        %1052 = vst [vmem:[#allocation3 + $0x9] sm:$0xff] %v1048
        %v1053 = vld [vmem:[#allocation3] sm:$0xff]
        %v1054 = vld [vmem:[#allocation3 + $0x8] sm:$0xff]
        %v1055 = vpack.c.bf16 %v1054, %v1053
        %v1056 = vld [vmem:[#allocation9] sm:$0xf]
        %v1057 = vld [vmem:[#allocation9 + $0x4] sm:$0xf]
        %v1058 = vld [vmem:[#allocation9 + $0x8] sm:$0xf]
        %v1059 = vld [vmem:[#allocation9 + $0xc] sm:$0xf]
        %v1060 = vld [vmem:[#allocation9 + $0x10] sm:$0xf]
        %v1061 = vld [vmem:[#allocation9 + $0x14] sm:$0xf]
        %v1062 = vld [vmem:[#allocation9 + $0x18] sm:$0xf]
        %v1063 = vld [vmem:[#allocation9 + $0x1c] sm:$0xf]
        %v1064 = vld [vmem:[#allocation9 + $0x20] sm:$0xf]
        %v1065 = vld [vmem:[#allocation9 + $0x24] sm:$0xf]
        %v1066 = vld [vmem:[#allocation9 + $0x28] sm:$0xf]
        %v1067 = vld [vmem:[#allocation9 + $0x2c] sm:$0xf]
        %v1068 = vld [vmem:[#allocation9 + $0x30] sm:$0xf]
        %v1069 = vld [vmem:[#allocation9 + $0x34] sm:$0xf]
        %v1070 = vld [vmem:[#allocation9 + $0x38] sm:$0xf]
        %v1071 = vld [vmem:[#allocation9 + $0x3c] sm:$0xf]
        %v1072 = vld [vmem:[#allocation3 + $0x1] sm:$0xff]
        %v1073 = vld [vmem:[#allocation3 + $0x9] sm:$0xff]
        %v1074 = vpack.c.bf16 %v1073, %v1072
        %s1075 = scalar_lea.vmem [#allocation9], 64
        %v1076 = vld [vmem:[%s1075] sm:$0xf]
        %v1077 = vld [vmem:[%s1075 + $0x4] sm:$0xf]
        %v1078 = vld [vmem:[%s1075 + $0x8] sm:$0xf]
        %v1079 = vld [vmem:[%s1075 + $0xc] sm:$0xf]
        %v1080 = vld [vmem:[%s1075 + $0x10] sm:$0xf]
        %v1081 = vld [vmem:[%s1075 + $0x14] sm:$0xf]
        %v1082 = vld [vmem:[%s1075 + $0x18] sm:$0xf]
        %v1083 = vld [vmem:[%s1075 + $0x1c] sm:$0xf]
        %v1084 = vld [vmem:[%s1075 + $0x20] sm:$0xf]
        %v1085 = vld [vmem:[%s1075 + $0x24] sm:$0xf]
        %v1086 = vld [vmem:[%s1075 + $0x28] sm:$0xf]
        %v1087 = vld [vmem:[%s1075 + $0x2c] sm:$0xf]
        %v1088 = vld [vmem:[%s1075 + $0x30] sm:$0xf]
        %v1089 = vld [vmem:[%s1075 + $0x34] sm:$0xf]
        %v1090 = vld [vmem:[%s1075 + $0x38] sm:$0xf]
        %v1091 = vld [vmem:[%s1075 + $0x3c] sm:$0xf]
        %v1108 = vunpack.c.l.b16 %v1076
        %v1109 = vunpack.c.l.b16 %v1077
        %v1110 = vunpack.c.l.b16 %v1078
        %v1111 = vunpack.c.l.b16 %v1079
        %v1112 = vunpack.c.l.b16 %v1080
        %v1113 = vunpack.c.l.b16 %v1081
        %v1114 = vunpack.c.l.b16 %v1082
        %v1115 = vunpack.c.l.b16 %v1083
        %v1116 = vunpack.c.l.b16 %v1084
        %v1117 = vunpack.c.l.b16 %v1085
        %v1118 = vunpack.c.l.b16 %v1086
        %v1119 = vunpack.c.l.b16 %v1087
        %v1120 = vunpack.c.l.b16 %v1088
        %v1121 = vunpack.c.l.b16 %v1089
        %v1122 = vunpack.c.l.b16 %v1090
        %v1123 = vunpack.c.l.b16 %v1091
        %v1124 = vpack.c.b16 %v1109, %v1108
        %v1125 = vpack.c.b16 %v1111, %v1110
        %v1126 = vpack.c.b16 %v1113, %v1112
        %v1127 = vpack.c.b16 %v1115, %v1114
        %v1128 = vpack.c.b16 %v1117, %v1116
        %v1129 = vpack.c.b16 %v1119, %v1118
        %v1130 = vpack.c.b16 %v1121, %v1120
        %v1131 = vpack.c.b16 %v1123, %v1122
        %1140 = vmatprep.subr.bf16.mxu0 0
        %1141 = vmatpush1.bf16.msra.mxu0 %v1131
        %1142 = vmatprep.subr.bf16.mxu0 0
        %1143 = vmatpush1.bf16.msra.mxu0 %v1130
        %1144 = vmatprep.subr.bf16.mxu0 0
        %1145 = vmatpush1.bf16.msra.mxu0 %v1129
        %1146 = vmatprep.subr.bf16.mxu0 0
        %1147 = vmatpush1.bf16.msra.mxu0 %v1128
        %1148 = vmatprep.subr.bf16.mxu0 0
        %1149 = vmatpush1.bf16.msra.mxu0 %v1127
        %1150 = vmatprep.subr.bf16.mxu0 0
        %1151 = vmatpush1.bf16.msra.mxu0 %v1126
        %1152 = vmatprep.subr.bf16.mxu0 0
        %1153 = vmatpush1.bf16.msra.mxu0 %v1125
        %1154 = vmatprep.subr.bf16.mxu0 0
        %1155 = vmatpush1.bf16.msra.mxu0 %v1124
        %1156 = vmatprep.subr.bf16.mxu0 0
        %1157 = vmatpush2.bf16.msra.mxu0 0
        %1158 = vmatprep.subr.bf16.mxu0 0
        %1159 = vmatpush2.bf16.msra.mxu0 0
        %1160 = vmatprep.subr.bf16.mxu0 0
        %1161 = vmatpush2.bf16.msra.mxu0 0
        %1162 = vmatprep.subr.bf16.mxu0 0
        %1163 = vmatpush2.bf16.msra.mxu0 0
        %1164 = vmatprep.subr.bf16.mxu0 0
        %1165 = vmatpush2.bf16.msra.mxu0 0
        %1166 = vmatprep.subr.bf16.mxu0 0
        %1167 = vmatpush2.bf16.msra.mxu0 0
        %1168 = vmatprep.subr.bf16.mxu0 0
        %1169 = vmatpush2.bf16.msra.mxu0 0
        %1170 = vmatprep.subr.bf16.mxu0 0
        %1171 = vmatpush2.bf16.msra.mxu0 0
        %1172 = vmatprep.mubr.bf16.mxu0 0
        %1173 = vmatmul.mubr.bf16.gmra.mxu0 %v1074
        %v1174 = vpop.f32.mrf.mxu0
        %v1175 = vadd.f32 0.0, %v1174
        %v1176 = vpop.f32.mrf.mxu0
        %v1177 = vpop.f32.mrf.mxu0
        %v1178 = vadd.f32 0.0, %v1177
        %v1179 = vpop.f32.mrf.mxu0
        %1180 = vdwg.mxu0
        %v1197 = vunpack.c.l.b16 %v1056
        %v1198 = vunpack.c.l.b16 %v1057
        %v1199 = vunpack.c.l.b16 %v1058
        %v1200 = vunpack.c.l.b16 %v1059
        %v1201 = vunpack.c.l.b16 %v1060
        %v1202 = vunpack.c.l.b16 %v1061
        %v1203 = vunpack.c.l.b16 %v1062
        %v1204 = vunpack.c.l.b16 %v1063
        %v1205 = vunpack.c.l.b16 %v1064
        %v1206 = vunpack.c.l.b16 %v1065
        %v1207 = vunpack.c.l.b16 %v1066
        %v1208 = vunpack.c.l.b16 %v1067
        %v1209 = vunpack.c.l.b16 %v1068
        %v1210 = vunpack.c.l.b16 %v1069
        %v1211 = vunpack.c.l.b16 %v1070
        %v1212 = vunpack.c.l.b16 %v1071
        %v1213 = vpack.c.b16 %v1198, %v1197
        %v1214 = vpack.c.b16 %v1200, %v1199
        %v1215 = vpack.c.b16 %v1202, %v1201
        %v1216 = vpack.c.b16 %v1204, %v1203
        %v1217 = vpack.c.b16 %v1206, %v1205
        %v1218 = vpack.c.b16 %v1208, %v1207
        %v1219 = vpack.c.b16 %v1210, %v1209
        %v1220 = vpack.c.b16 %v1212, %v1211
        %1229 = vmatprep.subr.bf16.mxu0 0
        %1230 = vmatpush1.bf16.msra.mxu0 %v1220
        %1231 = vmatprep.subr.bf16.mxu0 0
        %1232 = vmatpush1.bf16.msra.mxu0 %v1219
        %1233 = vmatprep.subr.bf16.mxu0 0
        %1234 = vmatpush1.bf16.msra.mxu0 %v1218
        %1235 = vmatprep.subr.bf16.mxu0 0
        %1236 = vmatpush1.bf16.msra.mxu0 %v1217
        %1237 = vmatprep.subr.bf16.mxu0 0
        %1238 = vmatpush1.bf16.msra.mxu0 %v1216
        %1239 = vmatprep.subr.bf16.mxu0 0
        %1240 = vmatpush1.bf16.msra.mxu0 %v1215
        %1241 = vmatprep.subr.bf16.mxu0 0
        %1242 = vmatpush1.bf16.msra.mxu0 %v1214
        %1243 = vmatprep.subr.bf16.mxu0 0
        %1244 = vmatpush1.bf16.msra.mxu0 %v1213
        %1245 = vmatprep.subr.bf16.mxu0 0
        %1246 = vmatpush2.bf16.msra.mxu0 0
        %1247 = vmatprep.subr.bf16.mxu0 0
        %1248 = vmatpush2.bf16.msra.mxu0 0
        %1249 = vmatprep.subr.bf16.mxu0 0
        %1250 = vmatpush2.bf16.msra.mxu0 0
        %1251 = vmatprep.subr.bf16.mxu0 0
        %1252 = vmatpush2.bf16.msra.mxu0 0
        %1253 = vmatprep.subr.bf16.mxu0 0
        %1254 = vmatpush2.bf16.msra.mxu0 0
        %1255 = vmatprep.subr.bf16.mxu0 0
        %1256 = vmatpush2.bf16.msra.mxu0 0
        %1257 = vmatprep.subr.bf16.mxu0 0
        %1258 = vmatpush2.bf16.msra.mxu0 0
        %1259 = vmatprep.subr.bf16.mxu0 0
        %1260 = vmatpush2.bf16.msra.mxu0 0
        %1261 = vmatprep.mubr.bf16.mxu0 0
        %1262 = vmatmul.mubr.bf16.gmra.mxu0 %v1055
        %v1263 = vpop.f32.mrf.mxu0
        %v1264 = vadd.f32 %v1175, %v1263
        %v1265 = vpop.f32.mrf.mxu0
        %v1266 = vpop.f32.mrf.mxu0
        %v1267 = vadd.f32 %v1178, %v1266
        %v1268 = vpop.f32.mrf.mxu0
        %1269 = vdwg.mxu0
        %v1270 = vld [vmem:[#allocation3 + $0x2] sm:$0xff]
        %v1271 = vld [vmem:[#allocation3 + $0xa] sm:$0xff]
        %v1272 = vpack.c.bf16 %v1271, %v1270
        %s1273 = scalar_lea.vmem [#allocation9], 128
        %v1274 = vld [vmem:[%s1273] sm:$0xf]
        %v1275 = vld [vmem:[%s1273 + $0x4] sm:$0xf]
        %v1276 = vld [vmem:[%s1273 + $0x8] sm:$0xf]
        %v1277 = vld [vmem:[%s1273 + $0xc] sm:$0xf]
        %v1278 = vld [vmem:[%s1273 + $0x10] sm:$0xf]
        %v1279 = vld [vmem:[%s1273 + $0x14] sm:$0xf]
        %v1280 = vld [vmem:[%s1273 + $0x18] sm:$0xf]
        %v1281 = vld [vmem:[%s1273 + $0x1c] sm:$0xf]
        %v1282 = vld [vmem:[%s1273 + $0x20] sm:$0xf]
        %v1283 = vld [vmem:[%s1273 + $0x24] sm:$0xf]
        %v1284 = vld [vmem:[%s1273 + $0x28] sm:$0xf]
        %v1285 = vld [vmem:[%s1273 + $0x2c] sm:$0xf]
        %v1286 = vld [vmem:[%s1273 + $0x30] sm:$0xf]
        %v1287 = vld [vmem:[%s1273 + $0x34] sm:$0xf]
        %v1288 = vld [vmem:[%s1273 + $0x38] sm:$0xf]
        %v1289 = vld [vmem:[%s1273 + $0x3c] sm:$0xf]
        %v1306 = vunpack.c.l.b16 %v1274
        %v1307 = vunpack.c.l.b16 %v1275
        %v1308 = vunpack.c.l.b16 %v1276
        %v1309 = vunpack.c.l.b16 %v1277
        %v1310 = vunpack.c.l.b16 %v1278
        %v1311 = vunpack.c.l.b16 %v1279
        %v1312 = vunpack.c.l.b16 %v1280
        %v1313 = vunpack.c.l.b16 %v1281
        %v1314 = vunpack.c.l.b16 %v1282
        %v1315 = vunpack.c.l.b16 %v1283
        %v1316 = vunpack.c.l.b16 %v1284
        %v1317 = vunpack.c.l.b16 %v1285
        %v1318 = vunpack.c.l.b16 %v1286
        %v1319 = vunpack.c.l.b16 %v1287
        %v1320 = vunpack.c.l.b16 %v1288
        %v1321 = vunpack.c.l.b16 %v1289
        %v1322 = vpack.c.b16 %v1307, %v1306
        %v1323 = vpack.c.b16 %v1309, %v1308
        %v1324 = vpack.c.b16 %v1311, %v1310
        %v1325 = vpack.c.b16 %v1313, %v1312
        %v1326 = vpack.c.b16 %v1315, %v1314
        %v1327 = vpack.c.b16 %v1317, %v1316
        %v1328 = vpack.c.b16 %v1319, %v1318
        %v1329 = vpack.c.b16 %v1321, %v1320
        %1338 = vmatprep.subr.bf16.mxu0 0
        %1339 = vmatpush1.bf16.msra.mxu0 %v1329
        %1340 = vmatprep.subr.bf16.mxu0 0
        %1341 = vmatpush1.bf16.msra.mxu0 %v1328
        %1342 = vmatprep.subr.bf16.mxu0 0
        %1343 = vmatpush1.bf16.msra.mxu0 %v1327
        %1344 = vmatprep.subr.bf16.mxu0 0
        %1345 = vmatpush1.bf16.msra.mxu0 %v1326
        %1346 = vmatprep.subr.bf16.mxu0 0
        %1347 = vmatpush1.bf16.msra.mxu0 %v1325
        %1348 = vmatprep.subr.bf16.mxu0 0
        %1349 = vmatpush1.bf16.msra.mxu0 %v1324
        %1350 = vmatprep.subr.bf16.mxu0 0
        %1351 = vmatpush1.bf16.msra.mxu0 %v1323
        %1352 = vmatprep.subr.bf16.mxu0 0
        %1353 = vmatpush1.bf16.msra.mxu0 %v1322
        %1354 = vmatprep.subr.bf16.mxu0 0
        %1355 = vmatpush2.bf16.msra.mxu0 0
        %1356 = vmatprep.subr.bf16.mxu0 0
        %1357 = vmatpush2.bf16.msra.mxu0 0
        %1358 = vmatprep.subr.bf16.mxu0 0
        %1359 = vmatpush2.bf16.msra.mxu0 0
        %1360 = vmatprep.subr.bf16.mxu0 0
        %1361 = vmatpush2.bf16.msra.mxu0 0
        %1362 = vmatprep.subr.bf16.mxu0 0
        %1363 = vmatpush2.bf16.msra.mxu0 0
        %1364 = vmatprep.subr.bf16.mxu0 0
        %1365 = vmatpush2.bf16.msra.mxu0 0
        %1366 = vmatprep.subr.bf16.mxu0 0
        %1367 = vmatpush2.bf16.msra.mxu0 0
        %1368 = vmatprep.subr.bf16.mxu0 0
        %1369 = vmatpush2.bf16.msra.mxu0 0
        %1370 = vmatprep.mubr.bf16.mxu0 0
        %1371 = vmatmul.mubr.bf16.gmra.mxu0 %v1272
        %v1372 = vpop.f32.mrf.mxu0
        %v1373 = vadd.f32 0.0, %v1372
        %v1374 = vpop.f32.mrf.mxu0
        %v1375 = vpop.f32.mrf.mxu0
        %v1376 = vadd.f32 0.0, %v1375
        %v1377 = vpop.f32.mrf.mxu0
        %1378 = vdwg.mxu0
        %v1379 = vadd.f32 %v1264, %v1373
        %v1380 = vadd.f32 %v1267, %v1376
        %v1381 = vld [vmem:[%s6] sm:$0x1]
        %v1383 = vlaneseq
        %v1384 = vshrl.u32 %v1383, 7
        %v1385 = vsub.s32 0, %v1384
        %v1386 = vrot.slane %v1381, %v1385
        %v1388 = vadd.f32 %v1379, %v1386
        %v1389 = vadd.f32 %v1380, %v1386
        %v1390 = vmax.f32 %v1388, 0.0
        %v1391 = vmax.f32 %v1389, 0.0
        %1392 = vst [vmem:[%s338] sm:$0xff] %v1390
        %1393 = vst [vmem:[%s338 + $0x8] sm:$0xff] %v1391
        %s1394 = sand.u32 %s190, 1
        %s1395 = scalar_lea.sflag [#allocation6], %s1394
        %s1396 = sand.u32 %s190, 1
        %s1397 = smul.addr %s1396, 16
        %s1398 = scalar_lea.vmem [#allocation10], %s1397
        // Predicated region
        $region61: #{tpu_custom_call.1} parent=47 // pred_check
          %p1399 = pneg %p200
        $region62: #{tpu_custom_call.1} parent=47 // pred_check_branch
          %1401 = sbr.rel (%p1399) target = $region64
        $region63: #{tpu_custom_call.1} parent=47 // pred_region
          %s1403 = ssub.s32 256, 256
          %1404 = vsyncadd %s1395, %s1403
          %s1405 = smul.addr %s25, 2
          %s1406 = smul.addr %s1405, 128
          %s1407 = scalar_lea.hbm %s7, %s1406
          %s1408 = sshll.u32 %s1398, 4
          %s1409 = int_to_ptr.vmem [resolvable:$true] %s1408
          %1414 = dma.vmem_to_hbm [thread:$0]  %s1409, 256, %s1407, %s1395, 128, 128, 8
        $region64: #{tpu_custom_call.1} parent=47 // pred_fallthru
          _
      $region48: #{tpu_custom_call.1} parent=5 // pred_fallthru
        _
      %p1415 = scmp.le.s32.totalorder 2, %s20
      // Predicated region
      $region65: #{tpu_custom_call.1} parent=5 // pred_check
        %p1416 = pneg %p1415
      $region66: #{tpu_custom_call.1} parent=5 // pred_check_branch
        %1418 = sbr.rel (%p1416) target = $region68
      $region67: #{tpu_custom_call.1} parent=5 // pred_region
        %s1419 = ssub.s32 %s20, 2
        // Predicated region
        $region69: #{tpu_custom_call.1} parent=67 // pred_check
          %p1420 = pneg %p206
        $region70: #{tpu_custom_call.1} parent=67 // pred_check_branch
          %1422 = sbr.rel (%p1420) target = $region72
        $region71: #{tpu_custom_call.1} parent=67 // pred_region
          %s1423 = sand.u32 %s191, 1
          %s1424 = scalar_lea.sflag [#allocation6], %s1423
          %s1425 = sand.u32 %s191, 1
          %s1426 = smul.addr %s1425, 16
          %s1427 = scalar_lea.vmem [#allocation10], %s1426
          %1428 = dma.done %s1424, 256
        $region72: #{tpu_custom_call.1} parent=67 // pred_fallthru
          _
      $region68: #{tpu_custom_call.1} parent=5 // pred_fallthru
        _
    $region6: #{tpu_custom_call.1} parent=1 // loop_footer
      %s24 = sadd.s32 1, %s20
    $region7: #{tpu_custom_call.1} parent=1 // loop_footer_branch
      %19 = sbr.rel target = $region3
    $region8: #{tpu_custom_call.1} parent=1 // loop_exit
      _
    %1429 = vsyncpa [#allocation5], 1
    %s1430 = scalar_lea.sflag [#allocation5], 1
    %1431 = vsyncpa %s1430, 1
    %1432 = vsyncpa [#allocation8], 1
    %1433 = vsyncpa [#allocation6], 1
    %s1434 = scalar_lea.sflag [#allocation6], 1
    %1435 = vsyncpa %s1434, 1

</llo_original>
